<compile_context>
chip_gen: v6e
topology: v6e:2x2x1
jax: 0.10.0
libtpu: 0.0.40
codegen_flags: <defaults>
</compile_context>

<pallas_src>
import jax
import jax.numpy as jnp
from jax.experimental import pallas as pl
from jax.experimental.pallas import tpu as pltpu

D_MODEL = 32
N_HEAD = 4
HEAD_DIM = D_MODEL // N_HEAD
SEQ = 8
BATCH = 2
EPS = 1e-5


def _layernorm(x, gamma, beta):
    mean = jnp.mean(x, axis=-1, keepdims=True)
    var = jnp.mean((x - mean) ** 2, axis=-1, keepdims=True)
    return (x - mean) * jax.lax.rsqrt(var + EPS) * gamma + beta


def _make_kernel(n_batch, seq_len, n_head, head_dim):
    emb = n_head * head_dim

    def kernel(x_ref, mask_ref,
               wfused_ref, bfused_ref, battn_ref,
               g1_ref, b1_ref, g2_ref, b2_ref,
               wfc_ref, bfc_ref, wpj_ref, bpj_ref,
               out_ref):
        x = x_ref[...]                                    # (N*L, E), batch folded into sublanes

        # ---------------- attention branch ----------------
        xn = _layernorm(x, g1_ref[...], b1_ref[...])
        # fused projection: [Q*scale | K | V@Wo-per-head]  -> (N*L, 2E + H*E)
        qkv = jnp.dot(xn, wfused_ref[...],
                      preferred_element_type=jnp.float32) + bfused_ref[...]

        per_batch = []
        for b in range(n_batch):                          # static (N = 2)
            rows = slice(b * seq_len, (b + 1) * seq_len)  # sublane slice (vreg-row aligned)
            mb = mask_ref[b]                              # (L, L) additive float mask
            acc = jnp.zeros((seq_len, emb), jnp.float32)  # full-32-lane register accumulator
            for h in range(n_head):                       # static (H = 4)
                qh = qkv[rows, h * head_dim:(h + 1) * head_dim]
                kh = qkv[rows, emb + h * head_dim: emb + (h + 1) * head_dim]
                vph = qkv[rows, 2 * emb + h * emb: 2 * emb + (h + 1) * emb]   # (L, E), Wo folded in
                # q @ k^T via last-dim contraction (no in-kernel transpose)
                s = jax.lax.dot_general(
                    qh, kh, (((1,), (1,)), ((), ())),
                    preferred_element_type=jnp.float32) + mb
                s = s - jnp.max(s, axis=-1, keepdims=True)
                p = jnp.exp(s)
                denom = jnp.sum(p, axis=-1, keepdims=True)
                # deferred normalization: unnormalized AV, then one EUP approx-recip mul
                o = jnp.dot(p, vph, preferred_element_type=jnp.float32)       # (L, E)
                acc = acc + o * pl.reciprocal(denom, approx=True)
            per_batch.append(acc)

        # sublane stack of the per-batch (L, E) blocks; bias bv@Wo^T + bo added once
        attn = jnp.concatenate(per_batch, axis=0) + battn_ref[...]
        x1 = x + attn

        # ---------------- MLP branch ----------------
        xn2 = _layernorm(x1, g2_ref[...], b2_ref[...])
        hpre = jnp.dot(xn2, wfc_ref[...], preferred_element_type=jnp.float32) + bfc_ref[...]
        hact = hpre * jax.nn.sigmoid(1.702 * hpre)        # QuickGELU
        y = jnp.dot(hact, wpj_ref[...], preferred_element_type=jnp.float32) + bpj_ref[...]

        out_ref[...] = x1 + y

    return kernel


def fuse_params(p):
    """One-time weight preprocessing (call at init, NOT per forward)."""
    scale = HEAD_DIM ** -0.5
    wq_t = p['wq'].T * scale                              # (E, E), softmax scale folded in
    wk_t = p['wk'].T                                      # (E, E)
    wv_t = p['wv'].T                                      # (E, E)
    wo_t = p['wo'].T                                      # (E, E)
    # fold Wo into V per head:  W_vo[:, h*E:(h+1)*E] = Wv^T[:, h] @ Wo^T[h, :]
    w_vo = jnp.concatenate(
        [wv_t[:, h * HEAD_DIM:(h + 1) * HEAD_DIM]
         @ wo_t[h * HEAD_DIM:(h + 1) * HEAD_DIM, :] for h in range(N_HEAD)],
        axis=1)                                           # (E, H*E)
    w_fused = jnp.concatenate([wq_t, wk_t, w_vo], axis=1)  # (E, 2E + H*E)
    b_fused = jnp.concatenate(
        [p['bq'] * scale, p['bk'],
         jnp.zeros((1, N_HEAD * D_MODEL), jnp.float32)], axis=1)   # (1, 2E + H*E)
    b_attn = p['bv'] @ wo_t + p['bo']                     # (1, E)  (= bv@Wo^T + bo)
    return dict(w_fused=w_fused, b_fused=b_fused, b_attn=b_attn,
                g1=p['g1'], b1=p['b1'], g2=p['g2'], b2=p['b2'],
                wfc_t=p['wfc'].T, bfc=p['bfc'],
                wpj_t=p['wpj'].T, bpj=p['bpj'])


def _block_flat(x_flat, attn_mask, fused, n_batch, seq_len):
    kernel = _make_kernel(n_batch, seq_len, N_HEAD, HEAD_DIM)
    operands = (x_flat, attn_mask,
                fused['w_fused'], fused['b_fused'], fused['b_attn'],
                fused['g1'], fused['b1'], fused['g2'], fused['b2'],
                fused['wfc_t'], fused['bfc'], fused['wpj_t'], fused['bpj'])
    return pl.pallas_call(
        kernel,
        out_shape=jax.ShapeDtypeStruct((n_batch * seq_len, D_MODEL), jnp.float32),
        in_specs=[pl.BlockSpec(memory_space=pltpu.MemorySpace.VMEM)] * len(operands),
        out_specs=pl.BlockSpec(memory_space=pltpu.MemorySpace.VMEM),
    )(*operands)


@jax.jit
def residual_attention_block(x_lne, attn_mask, fused):
    """x_lne: (L, N, E) float32; attn_mask: (N, L, L) additive float mask."""
    L, N, E = x_lne.shape
    # fold batch into the sublane axis: (L, N, E) -> (N, L, E) -> (N*L, E)
    x_flat = jnp.transpose(x_lne, (1, 0, 2)).reshape(N * L, E)
    out = _block_flat(x_flat, attn_mask, fused, N, L)
    out_lne = jnp.transpose(out.reshape(N, L, E), (1, 0, 2))
    return out_lne, attn_mask        # mirror the (x, attn_mask) tuple output


def init_params(key):
    ks = jax.random.split(key, 8)
    E = D_MODEL
    s = 0.02
    # nn.MultiheadAttention: in_proj_weight (3E, E) split as Wq/Wk/Wv; out_proj (E, E)
    wq = s * jax.random.normal(ks[0], (E, E), jnp.float32)
    wk = s * jax.random.normal(ks[1], (E, E), jnp.float32)
    wv = s * jax.random.normal(ks[2], (E, E), jnp.float32)
    wo = s * jax.random.normal(ks[3], (E, E), jnp.float32)
    wfc = s * jax.random.normal(ks[4], (4 * E, E), jnp.float32)
    wpj = s * jax.random.normal(ks[5], (E, 4 * E), jnp.float32)
    return dict(
        wq=wq, wk=wk, wv=wv,
        bq=0.01 * jnp.ones((1, E), jnp.float32),
        bk=-0.01 * jnp.ones((1, E), jnp.float32),
        bv=0.02 * jnp.ones((1, E), jnp.float32),
        wo=wo, bo=jnp.zeros((1, E), jnp.float32),
        g1=jnp.ones((1, E), jnp.float32), b1=jnp.zeros((1, E), jnp.float32),
        g2=jnp.ones((1, E), jnp.float32), b2=jnp.zeros((1, E), jnp.float32),
        wfc=wfc, bfc=0.01 * jnp.ones((1, 4 * E), jnp.float32),
        wpj=wpj, bpj=jnp.zeros((1, E), jnp.float32),
    )


def reference(x_lne, attn_mask, p):
    """Pure-JAX reference mirroring nn.MultiheadAttention semantics."""
    def ln(x, g, b):
        m = jnp.mean(x, -1, keepdims=True)
        v = jnp.mean((x - m) ** 2, -1, keepdims=True)
        return (x - m) / jnp.sqrt(v + EPS) * g + b

    x = jnp.transpose(x_lne, (1, 0, 2))               # (N, L, E)
    xn = ln(x, p['g1'], p['b1'])
    q = xn @ p['wq'].T + p['bq']
    k = xn @ p['wk'].T + p['bk']
    v = xn @ p['wv'].T + p['bv']
    N, L, E = x.shape
    def split(t):
        return jnp.transpose(t.reshape(N, L, N_HEAD, HEAD_DIM), (0, 2, 1, 3))
    qh, kh, vh = split(q) * (HEAD_DIM ** -0.5), split(k), split(v)
    s = jnp.einsum('nhld,nhmd->nhlm', qh, kh) + attn_mask[:, None, :, :]
    pr = jax.nn.softmax(s, axis=-1)
    o = jnp.einsum('nhlm,nhmd->nhld', pr, vh)
    o = jnp.transpose(o, (0, 2, 1, 3)).reshape(N, L, E)
    x1 = x + (o @ p['wo'].T + p['bo'])
    xn2 = ln(x1, p['g2'], p['b2'])
    h = xn2 @ p['wfc'].T + p['bfc']
    h = h * jax.nn.sigmoid(1.702 * h)
    y = x1 + (h @ p['wpj'].T + p['bpj'])
    return jnp.transpose(y, (1, 0, 2))


if __name__ == "__main__":
    key = jax.random.PRNGKey(0)
    kx, kp = jax.random.split(key)
    x = jax.random.normal(kx, (SEQ, BATCH, D_MODEL), jnp.float32)     # (L, N, E)
    # per-batch causal additive mask (N, L, L)
    causal = jnp.where(jnp.tril(jnp.ones((SEQ, SEQ), jnp.bool_)), 0.0, -1e9)
    attn_mask = jnp.broadcast_to(causal, (BATCH, SEQ, SEQ)).astype(jnp.float32)
    params = init_params(kp)
    fused = fuse_params(params)          # one-time weight prep, hoisted out of the call

    out, mask_out = residual_attention_block(x, attn_mask, fused)
    out = jax.block_until_ready(out)

    ref = reference(x, attn_mask, params)
    assert out.shape == (SEQ, BATCH, D_MODEL)
    # tolerance leaves headroom for the EUP approx reciprocal on the softmax denom
    # (relative ~1e-3 worst case; absolute error here is ~1e-5).
    assert jnp.allclose(out, ref, atol=2e-4, rtol=2e-4), "mismatch vs JAX reference"
    print("KERNEL_OK")
</pallas_src>

<mosaic_0001>
module attributes {stable_mosaic.version = 11 : i64} {
  func.func @kernel(%arg0: memref<16x32xf32, #tpu.memory_space<vmem>>, %arg1: memref<2x8x8xf32, #tpu.memory_space<vmem>>, %arg2: memref<32x192xf32, #tpu.memory_space<vmem>>, %arg3: memref<1x192xf32, #tpu.memory_space<vmem>>, %arg4: memref<1x32xf32, #tpu.memory_space<vmem>>, %arg5: memref<1x32xf32, #tpu.memory_space<vmem>>, %arg6: memref<1x32xf32, #tpu.memory_space<vmem>>, %arg7: memref<1x32xf32, #tpu.memory_space<vmem>>, %arg8: memref<1x32xf32, #tpu.memory_space<vmem>>, %arg9: memref<32x128xf32, #tpu.memory_space<vmem>>, %arg10: memref<1x128xf32, #tpu.memory_space<vmem>>, %arg11: memref<128x32xf32, #tpu.memory_space<vmem>>, %arg12: memref<1x32xf32, #tpu.memory_space<vmem>>, %arg13: memref<16x32xf32, #tpu.memory_space<vmem>>) attributes {dimension_semantics = [], scalar_prefetch = 0 : i64, scratch_operands = 0 : i64, tpu.core_type = #tpu.core_type<tc>} {
    %c0 = arith.constant 0 : index
    %c0_0 = arith.constant 0 : index
    %0 = vector.load %arg0[%c0, %c0_0] : memref<16x32xf32, #tpu.memory_space<vmem>>, vector<16x32xf32>
    %c0_1 = arith.constant 0 : index
    %c0_2 = arith.constant 0 : index
    %1 = vector.load %arg5[%c0_1, %c0_2] : memref<1x32xf32, #tpu.memory_space<vmem>>, vector<1x32xf32>
    %c0_3 = arith.constant 0 : index
    %c0_4 = arith.constant 0 : index
    %2 = vector.load %arg6[%c0_3, %c0_4] : memref<1x32xf32, #tpu.memory_space<vmem>>, vector<1x32xf32>
    %cst = arith.constant dense<0.000000e+00> : vector<16xf32>
    %3 = vector.multi_reduction <add>, %0, %cst [1] : vector<16x32xf32> to vector<16xf32>
    %4 = vector.shape_cast %3 : vector<16xf32> to vector<16x1xf32>
    %cst_5 = arith.constant 3.200000e+01 : f32
    %5 = vector.broadcast %cst_5 : f32 to vector<16x1xf32>
    %6 = arith.divf %4, %5 : vector<16x1xf32>
    %7 = vector.broadcast %6 : vector<16x1xf32> to vector<16x32xf32>
    %8 = arith.subf %0, %7 : vector<16x32xf32>
    %9 = arith.mulf %8, %8 : vector<16x32xf32>
    %cst_6 = arith.constant dense<0.000000e+00> : vector<16xf32>
    %10 = vector.multi_reduction <add>, %9, %cst_6 [1] : vector<16x32xf32> to vector<16xf32>
    %11 = vector.shape_cast %10 : vector<16xf32> to vector<16x1xf32>
    %cst_7 = arith.constant 3.200000e+01 : f32
    %12 = vector.broadcast %cst_7 : f32 to vector<16x1xf32>
    %13 = arith.divf %11, %12 : vector<16x1xf32>
    %14 = vector.broadcast %6 : vector<16x1xf32> to vector<16x32xf32>
    %15 = arith.subf %0, %14 : vector<16x32xf32>
    %cst_8 = arith.constant 9.99999974E-6 : f32
    %16 = vector.broadcast %cst_8 : f32 to vector<16x1xf32>
    %17 = arith.addf %13, %16 : vector<16x1xf32>
    %18 = math.rsqrt %17 : vector<16x1xf32>
    %19 = vector.broadcast %18 : vector<16x1xf32> to vector<16x32xf32>
    %20 = arith.mulf %15, %19 : vector<16x32xf32>
    %21 = vector.broadcast %1 : vector<1x32xf32> to vector<16x32xf32>
    %22 = arith.mulf %20, %21 : vector<16x32xf32>
    %23 = vector.broadcast %2 : vector<1x32xf32> to vector<16x32xf32>
    %24 = arith.addf %22, %23 : vector<16x32xf32>
    %c0_9 = arith.constant 0 : index
    %c0_10 = arith.constant 0 : index
    %25 = vector.load %arg2[%c0_9, %c0_10] : memref<32x192xf32, #tpu.memory_space<vmem>>, vector<32x192xf32>
    %cst_11 = arith.constant dense<0.000000e+00> : vector<16x192xf32>
    %26 = tpu.matmul %24, %25, %cst_11 {dimension_numbers = #tpu.dot_dimension_numbers<[1], [0], [0], [1], [0, 0, 1, 1], [], []>} : vector<16x32xf32>, vector<32x192xf32>, vector<16x192xf32> -> vector<16x192xf32>
    %c0_12 = arith.constant 0 : index
    %c0_13 = arith.constant 0 : index
    %27 = vector.load %arg3[%c0_12, %c0_13] : memref<1x192xf32, #tpu.memory_space<vmem>>, vector<1x192xf32>
    %28 = vector.broadcast %27 : vector<1x192xf32> to vector<16x192xf32>
    %29 = arith.addf %26, %28 : vector<16x192xf32>
    %c0_14 = arith.constant 0 : index
    %c0_15 = arith.constant 0 : index
    %c0_16 = arith.constant 0 : index
    %30 = vector.load %arg1[%c0_14, %c0_15, %c0_16] : memref<2x8x8xf32, #tpu.memory_space<vmem>>, vector<1x8x8xf32>
    %31 = vector.shape_cast %30 : vector<1x8x8xf32> to vector<8x8xf32>
    %cst_17 = arith.constant 0.000000e+00 : f32
    %32 = vector.broadcast %cst_17 : f32 to vector<8x32xf32>
    %33 = vector.extract_strided_slice %29 {offsets = [0, 0], sizes = [8, 8], strides = [1, 1]} : vector<16x192xf32> to vector<8x8xf32>
    %34 = vector.extract_strided_slice %29 {offsets = [0, 32], sizes = [8, 8], strides = [1, 1]} : vector<16x192xf32> to vector<8x8xf32>
    %35 = vector.extract_strided_slice %29 {offsets = [0, 64], sizes = [8, 32], strides = [1, 1]} : vector<16x192xf32> to vector<8x32xf32>
    %cst_18 = arith.constant dense<0.000000e+00> : vector<8x8xf32>
    %36 = tpu.matmul %33, %34, %cst_18 {dimension_numbers = #tpu.dot_dimension_numbers<[1], [1], [0], [0], [0, 0, 1, 0], [], []>} : vector<8x8xf32>, vector<8x8xf32>, vector<8x8xf32> -> vector<8x8xf32>
    %37 = arith.addf %36, %31 : vector<8x8xf32>
    %cst_19 = arith.constant dense<0xFF800000> : vector<8xf32>
    %38 = vector.multi_reduction <maximumf>, %37, %cst_19 [1] : vector<8x8xf32> to vector<8xf32>
    %39 = vector.shape_cast %38 : vector<8xf32> to vector<8x1xf32>
    %40 = vector.broadcast %39 : vector<8x1xf32> to vector<8x8xf32>
    %41 = arith.subf %37, %40 : vector<8x8xf32>
    %42 = math.exp %41 : vector<8x8xf32>
    %cst_20 = arith.constant dense<0.000000e+00> : vector<8xf32>
    %43 = vector.multi_reduction <add>, %42, %cst_20 [1] : vector<8x8xf32> to vector<8xf32>
    %44 = vector.shape_cast %43 : vector<8xf32> to vector<8x1xf32>
    %cst_21 = arith.constant dense<0.000000e+00> : vector<8x32xf32>
    %45 = tpu.matmul %42, %35, %cst_21 {dimension_numbers = #tpu.dot_dimension_numbers<[1], [0], [0], [1], [0, 0, 1, 1], [], []>} : vector<8x8xf32>, vector<8x32xf32>, vector<8x32xf32> -> vector<8x32xf32>
    %46 = tpu.reciprocal %44 {approx = true} : vector<8x1xf32> -> vector<8x1xf32>
    %47 = vector.broadcast %46 : vector<8x1xf32> to vector<8x32xf32>
    %48 = arith.mulf %45, %47 : vector<8x32xf32>
    %49 = arith.addf %32, %48 : vector<8x32xf32>
    %50 = vector.extract_strided_slice %29 {offsets = [0, 8], sizes = [8, 8], strides = [1, 1]} : vector<16x192xf32> to vector<8x8xf32>
    %51 = vector.extract_strided_slice %29 {offsets = [0, 40], sizes = [8, 8], strides = [1, 1]} : vector<16x192xf32> to vector<8x8xf32>
    %52 = vector.extract_strided_slice %29 {offsets = [0, 96], sizes = [8, 32], strides = [1, 1]} : vector<16x192xf32> to vector<8x32xf32>
    %cst_22 = arith.constant dense<0.000000e+00> : vector<8x8xf32>
    %53 = tpu.matmul %50, %51, %cst_22 {dimension_numbers = #tpu.dot_dimension_numbers<[1], [1], [0], [0], [0, 0, 1, 0], [], []>} : vector<8x8xf32>, vector<8x8xf32>, vector<8x8xf32> -> vector<8x8xf32>
    %54 = arith.addf %53, %31 : vector<8x8xf32>
    %cst_23 = arith.constant dense<0xFF800000> : vector<8xf32>
    %55 = vector.multi_reduction <maximumf>, %54, %cst_23 [1] : vector<8x8xf32> to vector<8xf32>
    %56 = vector.shape_cast %55 : vector<8xf32> to vector<8x1xf32>
    %57 = vector.broadcast %56 : vector<8x1xf32> to vector<8x8xf32>
    %58 = arith.subf %54, %57 : vector<8x8xf32>
    %59 = math.exp %58 : vector<8x8xf32>
    %cst_24 = arith.constant dense<0.000000e+00> : vector<8xf32>
    %60 = vector.multi_reduction <add>, %59, %cst_24 [1] : vector<8x8xf32> to vector<8xf32>
    %61 = vector.shape_cast %60 : vector<8xf32> to vector<8x1xf32>
    %cst_25 = arith.constant dense<0.000000e+00> : vector<8x32xf32>
    %62 = tpu.matmul %59, %52, %cst_25 {dimension_numbers = #tpu.dot_dimension_numbers<[1], [0], [0], [1], [0, 0, 1, 1], [], []>} : vector<8x8xf32>, vector<8x32xf32>, vector<8x32xf32> -> vector<8x32xf32>
    %63 = tpu.reciprocal %61 {approx = true} : vector<8x1xf32> -> vector<8x1xf32>
    %64 = vector.broadcast %63 : vector<8x1xf32> to vector<8x32xf32>
    %65 = arith.mulf %62, %64 : vector<8x32xf32>
    %66 = arith.addf %49, %65 : vector<8x32xf32>
    %67 = vector.extract_strided_slice %29 {offsets = [0, 16], sizes = [8, 8], strides = [1, 1]} : vector<16x192xf32> to vector<8x8xf32>
    %68 = vector.extract_strided_slice %29 {offsets = [0, 48], sizes = [8, 8], strides = [1, 1]} : vector<16x192xf32> to vector<8x8xf32>
    %69 = vector.extract_strided_slice %29 {offsets = [0, 128], sizes = [8, 32], strides = [1, 1]} : vector<16x192xf32> to vector<8x32xf32>
    %cst_26 = arith.constant dense<0.000000e+00> : vector<8x8xf32>
    %70 = tpu.matmul %67, %68, %cst_26 {dimension_numbers = #tpu.dot_dimension_numbers<[1], [1], [0], [0], [0, 0, 1, 0], [], []>} : vector<8x8xf32>, vector<8x8xf32>, vector<8x8xf32> -> vector<8x8xf32>
    %71 = arith.addf %70, %31 : vector<8x8xf32>
    %cst_27 = arith.constant dense<0xFF800000> : vector<8xf32>
    %72 = vector.multi_reduction <maximumf>, %71, %cst_27 [1] : vector<8x8xf32> to vector<8xf32>
    %73 = vector.shape_cast %72 : vector<8xf32> to vector<8x1xf32>
    %74 = vector.broadcast %73 : vector<8x1xf32> to vector<8x8xf32>
    %75 = arith.subf %71, %74 : vector<8x8xf32>
    %76 = math.exp %75 : vector<8x8xf32>
    %cst_28 = arith.constant dense<0.000000e+00> : vector<8xf32>
    %77 = vector.multi_reduction <add>, %76, %cst_28 [1] : vector<8x8xf32> to vector<8xf32>
    %78 = vector.shape_cast %77 : vector<8xf32> to vector<8x1xf32>
    %cst_29 = arith.constant dense<0.000000e+00> : vector<8x32xf32>
    %79 = tpu.matmul %76, %69, %cst_29 {dimension_numbers = #tpu.dot_dimension_numbers<[1], [0], [0], [1], [0, 0, 1, 1], [], []>} : vector<8x8xf32>, vector<8x32xf32>, vector<8x32xf32> -> vector<8x32xf32>
    %80 = tpu.reciprocal %78 {approx = true} : vector<8x1xf32> -> vector<8x1xf32>
    %81 = vector.broadcast %80 : vector<8x1xf32> to vector<8x32xf32>
    %82 = arith.mulf %79, %81 : vector<8x32xf32>
    %83 = arith.addf %66, %82 : vector<8x32xf32>
    %84 = vector.extract_strided_slice %29 {offsets = [0, 24], sizes = [8, 8], strides = [1, 1]} : vector<16x192xf32> to vector<8x8xf32>
    %85 = vector.extract_strided_slice %29 {offsets = [0, 56], sizes = [8, 8], strides = [1, 1]} : vector<16x192xf32> to vector<8x8xf32>
    %86 = vector.extract_strided_slice %29 {offsets = [0, 160], sizes = [8, 32], strides = [1, 1]} : vector<16x192xf32> to vector<8x32xf32>
    %cst_30 = arith.constant dense<0.000000e+00> : vector<8x8xf32>
    %87 = tpu.matmul %84, %85, %cst_30 {dimension_numbers = #tpu.dot_dimension_numbers<[1], [1], [0], [0], [0, 0, 1, 0], [], []>} : vector<8x8xf32>, vector<8x8xf32>, vector<8x8xf32> -> vector<8x8xf32>
    %88 = arith.addf %87, %31 : vector<8x8xf32>
    %cst_31 = arith.constant dense<0xFF800000> : vector<8xf32>
    %89 = vector.multi_reduction <maximumf>, %88, %cst_31 [1] : vector<8x8xf32> to vector<8xf32>
    %90 = vector.shape_cast %89 : vector<8xf32> to vector<8x1xf32>
    %91 = vector.broadcast %90 : vector<8x1xf32> to vector<8x8xf32>
    %92 = arith.subf %88, %91 : vector<8x8xf32>
    %93 = math.exp %92 : vector<8x8xf32>
    %cst_32 = arith.constant dense<0.000000e+00> : vector<8xf32>
    %94 = vector.multi_reduction <add>, %93, %cst_32 [1] : vector<8x8xf32> to vector<8xf32>
    %95 = vector.shape_cast %94 : vector<8xf32> to vector<8x1xf32>
    %cst_33 = arith.constant dense<0.000000e+00> : vector<8x32xf32>
    %96 = tpu.matmul %93, %86, %cst_33 {dimension_numbers = #tpu.dot_dimension_numbers<[1], [0], [0], [1], [0, 0, 1, 1], [], []>} : vector<8x8xf32>, vector<8x32xf32>, vector<8x32xf32> -> vector<8x32xf32>
    %97 = tpu.reciprocal %95 {approx = true} : vector<8x1xf32> -> vector<8x1xf32>
    %98 = vector.broadcast %97 : vector<8x1xf32> to vector<8x32xf32>
    %99 = arith.mulf %96, %98 : vector<8x32xf32>
    %100 = arith.addf %83, %99 : vector<8x32xf32>
    %c1 = arith.constant 1 : index
    %c0_34 = arith.constant 0 : index
    %c0_35 = arith.constant 0 : index
    %101 = vector.load %arg1[%c1, %c0_34, %c0_35] : memref<2x8x8xf32, #tpu.memory_space<vmem>>, vector<1x8x8xf32>
    %102 = vector.shape_cast %101 : vector<1x8x8xf32> to vector<8x8xf32>
    %cst_36 = arith.constant 0.000000e+00 : f32
    %103 = vector.broadcast %cst_36 : f32 to vector<8x32xf32>
    %104 = vector.extract_strided_slice %29 {offsets = [8, 0], sizes = [8, 8], strides = [1, 1]} : vector<16x192xf32> to vector<8x8xf32>
    %105 = vector.extract_strided_slice %29 {offsets = [8, 32], sizes = [8, 8], strides = [1, 1]} : vector<16x192xf32> to vector<8x8xf32>
    %106 = vector.extract_strided_slice %29 {offsets = [8, 64], sizes = [8, 32], strides = [1, 1]} : vector<16x192xf32> to vector<8x32xf32>
    %cst_37 = arith.constant dense<0.000000e+00> : vector<8x8xf32>
    %107 = tpu.matmul %104, %105, %cst_37 {dimension_numbers = #tpu.dot_dimension_numbers<[1], [1], [0], [0], [0, 0, 1, 0], [], []>} : vector<8x8xf32>, vector<8x8xf32>, vector<8x8xf32> -> vector<8x8xf32>
    %108 = arith.addf %107, %102 : vector<8x8xf32>
    %cst_38 = arith.constant dense<0xFF800000> : vector<8xf32>
    %109 = vector.multi_reduction <maximumf>, %108, %cst_38 [1] : vector<8x8xf32> to vector<8xf32>
    %110 = vector.shape_cast %109 : vector<8xf32> to vector<8x1xf32>
    %111 = vector.broadcast %110 : vector<8x1xf32> to vector<8x8xf32>
    %112 = arith.subf %108, %111 : vector<8x8xf32>
    %113 = math.exp %112 : vector<8x8xf32>
    %cst_39 = arith.constant dense<0.000000e+00> : vector<8xf32>
    %114 = vector.multi_reduction <add>, %113, %cst_39 [1] : vector<8x8xf32> to vector<8xf32>
    %115 = vector.shape_cast %114 : vector<8xf32> to vector<8x1xf32>
    %cst_40 = arith.constant dense<0.000000e+00> : vector<8x32xf32>
    %116 = tpu.matmul %113, %106, %cst_40 {dimension_numbers = #tpu.dot_dimension_numbers<[1], [0], [0], [1], [0, 0, 1, 1], [], []>} : vector<8x8xf32>, vector<8x32xf32>, vector<8x32xf32> -> vector<8x32xf32>
    %117 = tpu.reciprocal %115 {approx = true} : vector<8x1xf32> -> vector<8x1xf32>
    %118 = vector.broadcast %117 : vector<8x1xf32> to vector<8x32xf32>
    %119 = arith.mulf %116, %118 : vector<8x32xf32>
    %120 = arith.addf %103, %119 : vector<8x32xf32>
    %121 = vector.extract_strided_slice %29 {offsets = [8, 8], sizes = [8, 8], strides = [1, 1]} : vector<16x192xf32> to vector<8x8xf32>
    %122 = vector.extract_strided_slice %29 {offsets = [8, 40], sizes = [8, 8], strides = [1, 1]} : vector<16x192xf32> to vector<8x8xf32>
    %123 = vector.extract_strided_slice %29 {offsets = [8, 96], sizes = [8, 32], strides = [1, 1]} : vector<16x192xf32> to vector<8x32xf32>
    %cst_41 = arith.constant dense<0.000000e+00> : vector<8x8xf32>
    %124 = tpu.matmul %121, %122, %cst_41 {dimension_numbers = #tpu.dot_dimension_numbers<[1], [1], [0], [0], [0, 0, 1, 0], [], []>} : vector<8x8xf32>, vector<8x8xf32>, vector<8x8xf32> -> vector<8x8xf32>
    %125 = arith.addf %124, %102 : vector<8x8xf32>
    %cst_42 = arith.constant dense<0xFF800000> : vector<8xf32>
    %126 = vector.multi_reduction <maximumf>, %125, %cst_42 [1] : vector<8x8xf32> to vector<8xf32>
    %127 = vector.shape_cast %126 : vector<8xf32> to vector<8x1xf32>
    %128 = vector.broadcast %127 : vector<8x1xf32> to vector<8x8xf32>
    %129 = arith.subf %125, %128 : vector<8x8xf32>
    %130 = math.exp %129 : vector<8x8xf32>
    %cst_43 = arith.constant dense<0.000000e+00> : vector<8xf32>
    %131 = vector.multi_reduction <add>, %130, %cst_43 [1] : vector<8x8xf32> to vector<8xf32>
    %132 = vector.shape_cast %131 : vector<8xf32> to vector<8x1xf32>
    %cst_44 = arith.constant dense<0.000000e+00> : vector<8x32xf32>
    %133 = tpu.matmul %130, %123, %cst_44 {dimension_numbers = #tpu.dot_dimension_numbers<[1], [0], [0], [1], [0, 0, 1, 1], [], []>} : vector<8x8xf32>, vector<8x32xf32>, vector<8x32xf32> -> vector<8x32xf32>
    %134 = tpu.reciprocal %132 {approx = true} : vector<8x1xf32> -> vector<8x1xf32>
    %135 = vector.broadcast %134 : vector<8x1xf32> to vector<8x32xf32>
    %136 = arith.mulf %133, %135 : vector<8x32xf32>
    %137 = arith.addf %120, %136 : vector<8x32xf32>
    %138 = vector.extract_strided_slice %29 {offsets = [8, 16], sizes = [8, 8], strides = [1, 1]} : vector<16x192xf32> to vector<8x8xf32>
    %139 = vector.extract_strided_slice %29 {offsets = [8, 48], sizes = [8, 8], strides = [1, 1]} : vector<16x192xf32> to vector<8x8xf32>
    %140 = vector.extract_strided_slice %29 {offsets = [8, 128], sizes = [8, 32], strides = [1, 1]} : vector<16x192xf32> to vector<8x32xf32>
    %cst_45 = arith.constant dense<0.000000e+00> : vector<8x8xf32>
    %141 = tpu.matmul %138, %139, %cst_45 {dimension_numbers = #tpu.dot_dimension_numbers<[1], [1], [0], [0], [0, 0, 1, 0], [], []>} : vector<8x8xf32>, vector<8x8xf32>, vector<8x8xf32> -> vector<8x8xf32>
    %142 = arith.addf %141, %102 : vector<8x8xf32>
    %cst_46 = arith.constant dense<0xFF800000> : vector<8xf32>
    %143 = vector.multi_reduction <maximumf>, %142, %cst_46 [1] : vector<8x8xf32> to vector<8xf32>
    %144 = vector.shape_cast %143 : vector<8xf32> to vector<8x1xf32>
    %145 = vector.broadcast %144 : vector<8x1xf32> to vector<8x8xf32>
    %146 = arith.subf %142, %145 : vector<8x8xf32>
    %147 = math.exp %146 : vector<8x8xf32>
    %cst_47 = arith.constant dense<0.000000e+00> : vector<8xf32>
    %148 = vector.multi_reduction <add>, %147, %cst_47 [1] : vector<8x8xf32> to vector<8xf32>
    %149 = vector.shape_cast %148 : vector<8xf32> to vector<8x1xf32>
    %cst_48 = arith.constant dense<0.000000e+00> : vector<8x32xf32>
    %150 = tpu.matmul %147, %140, %cst_48 {dimension_numbers = #tpu.dot_dimension_numbers<[1], [0], [0], [1], [0, 0, 1, 1], [], []>} : vector<8x8xf32>, vector<8x32xf32>, vector<8x32xf32> -> vector<8x32xf32>
    %151 = tpu.reciprocal %149 {approx = true} : vector<8x1xf32> -> vector<8x1xf32>
    %152 = vector.broadcast %151 : vector<8x1xf32> to vector<8x32xf32>
    %153 = arith.mulf %150, %152 : vector<8x32xf32>
    %154 = arith.addf %137, %153 : vector<8x32xf32>
    %155 = vector.extract_strided_slice %29 {offsets = [8, 24], sizes = [8, 8], strides = [1, 1]} : vector<16x192xf32> to vector<8x8xf32>
    %156 = vector.extract_strided_slice %29 {offsets = [8, 56], sizes = [8, 8], strides = [1, 1]} : vector<16x192xf32> to vector<8x8xf32>
    %157 = vector.extract_strided_slice %29 {offsets = [8, 160], sizes = [8, 32], strides = [1, 1]} : vector<16x192xf32> to vector<8x32xf32>
    %cst_49 = arith.constant dense<0.000000e+00> : vector<8x8xf32>
    %158 = tpu.matmul %155, %156, %cst_49 {dimension_numbers = #tpu.dot_dimension_numbers<[1], [1], [0], [0], [0, 0, 1, 0], [], []>} : vector<8x8xf32>, vector<8x8xf32>, vector<8x8xf32> -> vector<8x8xf32>
    %159 = arith.addf %158, %102 : vector<8x8xf32>
    %cst_50 = arith.constant dense<0xFF800000> : vector<8xf32>
    %160 = vector.multi_reduction <maximumf>, %159, %cst_50 [1] : vector<8x8xf32> to vector<8xf32>
    %161 = vector.shape_cast %160 : vector<8xf32> to vector<8x1xf32>
    %162 = vector.broadcast %161 : vector<8x1xf32> to vector<8x8xf32>
    %163 = arith.subf %159, %162 : vector<8x8xf32>
    %164 = math.exp %163 : vector<8x8xf32>
    %cst_51 = arith.constant dense<0.000000e+00> : vector<8xf32>
    %165 = vector.multi_reduction <add>, %164, %cst_51 [1] : vector<8x8xf32> to vector<8xf32>
    %166 = vector.shape_cast %165 : vector<8xf32> to vector<8x1xf32>
    %cst_52 = arith.constant dense<0.000000e+00> : vector<8x32xf32>
    %167 = tpu.matmul %164, %157, %cst_52 {dimension_numbers = #tpu.dot_dimension_numbers<[1], [0], [0], [1], [0, 0, 1, 1], [], []>} : vector<8x8xf32>, vector<8x32xf32>, vector<8x32xf32> -> vector<8x32xf32>
    %168 = tpu.reciprocal %166 {approx = true} : vector<8x1xf32> -> vector<8x1xf32>
    %169 = vector.broadcast %168 : vector<8x1xf32> to vector<8x32xf32>
    %170 = arith.mulf %167, %169 : vector<8x32xf32>
    %171 = arith.addf %154, %170 : vector<8x32xf32>
    %172 = tpu.concatenate %100, %171 in 0 : vector<8x32xf32>, vector<8x32xf32> -> vector<16x32xf32>
    %c0_53 = arith.constant 0 : index
    %c0_54 = arith.constant 0 : index
    %173 = vector.load %arg4[%c0_53, %c0_54] : memref<1x32xf32, #tpu.memory_space<vmem>>, vector<1x32xf32>
    %174 = vector.broadcast %173 : vector<1x32xf32> to vector<16x32xf32>
    %175 = arith.addf %172, %174 : vector<16x32xf32>
    %176 = arith.addf %0, %175 : vector<16x32xf32>
    %c0_55 = arith.constant 0 : index
    %c0_56 = arith.constant 0 : index
    %177 = vector.load %arg7[%c0_55, %c0_56] : memref<1x32xf32, #tpu.memory_space<vmem>>, vector<1x32xf32>
    %c0_57 = arith.constant 0 : index
    %c0_58 = arith.constant 0 : index
    %178 = vector.load %arg8[%c0_57, %c0_58] : memref<1x32xf32, #tpu.memory_space<vmem>>, vector<1x32xf32>
    %cst_59 = arith.constant dense<0.000000e+00> : vector<16xf32>
    %179 = vector.multi_reduction <add>, %176, %cst_59 [1] : vector<16x32xf32> to vector<16xf32>
    %180 = vector.shape_cast %179 : vector<16xf32> to vector<16x1xf32>
    %cst_60 = arith.constant 3.200000e+01 : f32
    %181 = vector.broadcast %cst_60 : f32 to vector<16x1xf32>
    %182 = arith.divf %180, %181 : vector<16x1xf32>
    %183 = vector.broadcast %182 : vector<16x1xf32> to vector<16x32xf32>
    %184 = arith.subf %176, %183 : vector<16x32xf32>
    %185 = arith.mulf %184, %184 : vector<16x32xf32>
    %cst_61 = arith.constant dense<0.000000e+00> : vector<16xf32>
    %186 = vector.multi_reduction <add>, %185, %cst_61 [1] : vector<16x32xf32> to vector<16xf32>
    %187 = vector.shape_cast %186 : vector<16xf32> to vector<16x1xf32>
    %cst_62 = arith.constant 3.200000e+01 : f32
    %188 = vector.broadcast %cst_62 : f32 to vector<16x1xf32>
    %189 = arith.divf %187, %188 : vector<16x1xf32>
    %190 = vector.broadcast %182 : vector<16x1xf32> to vector<16x32xf32>
    %191 = arith.subf %176, %190 : vector<16x32xf32>
    %cst_63 = arith.constant 9.99999974E-6 : f32
    %192 = vector.broadcast %cst_63 : f32 to vector<16x1xf32>
    %193 = arith.addf %189, %192 : vector<16x1xf32>
    %194 = math.rsqrt %193 : vector<16x1xf32>
    %195 = vector.broadcast %194 : vector<16x1xf32> to vector<16x32xf32>
    %196 = arith.mulf %191, %195 : vector<16x32xf32>
    %197 = vector.broadcast %177 : vector<1x32xf32> to vector<16x32xf32>
    %198 = arith.mulf %196, %197 : vector<16x32xf32>
    %199 = vector.broadcast %178 : vector<1x32xf32> to vector<16x32xf32>
    %200 = arith.addf %198, %199 : vector<16x32xf32>
    %c0_64 = arith.constant 0 : index
    %c0_65 = arith.constant 0 : index
    %201 = vector.load %arg9[%c0_64, %c0_65] : memref<32x128xf32, #tpu.memory_space<vmem>>, vector<32x128xf32>
    %cst_66 = arith.constant dense<0.000000e+00> : vector<16x128xf32>
    %202 = tpu.matmul %200, %201, %cst_66 {dimension_numbers = #tpu.dot_dimension_numbers<[1], [0], [0], [1], [0, 0, 1, 1], [], []>} : vector<16x32xf32>, vector<32x128xf32>, vector<16x128xf32> -> vector<16x128xf32>
    %c0_67 = arith.constant 0 : index
    %c0_68 = arith.constant 0 : index
    %203 = vector.load %arg10[%c0_67, %c0_68] : memref<1x128xf32, #tpu.memory_space<vmem>>, vector<1x128xf32>
    %204 = vector.broadcast %203 : vector<1x128xf32> to vector<16x128xf32>
    %205 = arith.addf %202, %204 : vector<16x128xf32>
    %cst_69 = arith.constant 1.702000e+00 : f32
    %206 = vector.broadcast %cst_69 : f32 to vector<16x128xf32>
    %207 = arith.mulf %206, %205 : vector<16x128xf32>
    %208 = arith.negf %207 : vector<16x128xf32>
    %209 = math.exp %208 : vector<16x128xf32>
    %cst_70 = arith.constant 1.000000e+00 : f32
    %210 = vector.broadcast %cst_70 : f32 to vector<16x128xf32>
    %211 = arith.addf %210, %209 : vector<16x128xf32>
    %212 = arith.divf %210, %211 : vector<16x128xf32>
    %213 = arith.mulf %205, %212 : vector<16x128xf32>
    %c0_71 = arith.constant 0 : index
    %c0_72 = arith.constant 0 : index
    %214 = vector.load %arg11[%c0_71, %c0_72] : memref<128x32xf32, #tpu.memory_space<vmem>>, vector<128x32xf32>
    %cst_73 = arith.constant dense<0.000000e+00> : vector<16x32xf32>
    %215 = tpu.matmul %213, %214, %cst_73 {dimension_numbers = #tpu.dot_dimension_numbers<[1], [0], [0], [1], [0, 0, 1, 1], [], []>} : vector<16x128xf32>, vector<128x32xf32>, vector<16x32xf32> -> vector<16x32xf32>
    %c0_74 = arith.constant 0 : index
    %c0_75 = arith.constant 0 : index
    %216 = vector.load %arg12[%c0_74, %c0_75] : memref<1x32xf32, #tpu.memory_space<vmem>>, vector<1x32xf32>
    %217 = vector.broadcast %216 : vector<1x32xf32> to vector<16x32xf32>
    %218 = arith.addf %215, %217 : vector<16x32xf32>
    %219 = arith.addf %176, %218 : vector<16x32xf32>
    %c0_76 = arith.constant 0 : index
    %c0_77 = arith.constant 0 : index
    %220 = vector.load %arg13[%c0_76, %c0_77] : memref<16x32xf32, #tpu.memory_space<vmem>>, vector<16x32xf32>
    tpu.vector_store %arg13[%c0_76, %c0_77], %219 {strides = array<i32>} : memref<16x32xf32, #tpu.memory_space<vmem>>, vector<16x32xf32>,
    return
  }
}

</mosaic_0001>

<llo_original>
// kernel: residual_attention_block.1
$region0: #{residual_attention_block.1}
  #allocation0 [shape = 'u32[]', space=smem, size = 0x4, offset = 0x4, fixed_abs, tag = 'smem constant byte address 0x4 - core index']
  #allocation1 [shape = 'u32[144,128]{1,0:T(1,128)}', space=vmem, size = 0x12000, scoped, tag = 'internal scratch']
  %s0 = inlined_call_operand.vmem [shape: f32[16,32], index: 0, kind: input, shape index: {}]
  %s1 = inlined_call_operand.vmem [shape: f32[2,8,8], index: 1, kind: input, shape index: {}]
  %s2 = inlined_call_operand.vmem [shape: f32[32,192], index: 2, kind: input, shape index: {}]
  %s3 = inlined_call_operand.vmem [shape: f32[1,192], index: 3, kind: input, shape index: {}]
  %s4 = inlined_call_operand.vmem [shape: f32[1,32], index: 4, kind: input, shape index: {}]
  %s5 = inlined_call_operand.vmem [shape: f32[1,32], index: 5, kind: input, shape index: {}]
  %s6 = inlined_call_operand.vmem [shape: f32[1,32], index: 6, kind: input, shape index: {}]
  %s7 = inlined_call_operand.vmem [shape: f32[1,32], index: 7, kind: input, shape index: {}]
  %s8 = inlined_call_operand.vmem [shape: f32[1,32], index: 8, kind: input, shape index: {}]
  %s9 = inlined_call_operand.vmem [shape: f32[32,128], index: 9, kind: input, shape index: {}]
  %s10 = inlined_call_operand.vmem [shape: f32[1,128], index: 10, kind: input, shape index: {}]
  %s11 = inlined_call_operand.vmem [shape: f32[128,32], index: 11, kind: input, shape index: {}]
  %s12 = inlined_call_operand.vmem [shape: f32[1,32], index: 12, kind: input, shape index: {}]
  %s13 = inlined_call_operand.vmem [shape: f32[16,32], index: 13, kind: output, shape index: {}]
  %s14 = sld [smem:[#allocation0]]
  $region62: #{residual_attention_block.1} parent=0
    _
  %s16 = ssub.s32 1, %s14
  %s17 = scalar_select 0, %s16, %s14
  // Predicated region
  $region2: #{residual_attention_block.1} parent=0 // pred_check
    _
  $region3: #{residual_attention_block.1} parent=0 // pred_check_branch
    %19 = sbr.rel (0) target = $region5
  $region4: #{residual_attention_block.1} parent=0 // pred_region
    _
  $region5: #{residual_attention_block.1} parent=0 // pred_fallthru
    _
  // Predicated region
  $region6: #{residual_attention_block.1} parent=0 // pred_check
    _
  $region7: #{residual_attention_block.1} parent=0 // pred_check_branch
    %21 = sbr.rel (0) target = $region9
  $region8: #{residual_attention_block.1} parent=0 // pred_region
    _
  $region9: #{residual_attention_block.1} parent=0 // pred_fallthru
    _
  // Predicated region
  $region10: #{residual_attention_block.1} parent=0 // pred_check
    _
  $region11: #{residual_attention_block.1} parent=0 // pred_check_branch
    %23 = sbr.rel (0) target = $region13
  $region12: #{residual_attention_block.1} parent=0 // pred_region
    _
  $region13: #{residual_attention_block.1} parent=0 // pred_fallthru
    _
  // Predicated region
  $region14: #{residual_attention_block.1} parent=0 // pred_check
    _
  $region15: #{residual_attention_block.1} parent=0 // pred_check_branch
    %25 = sbr.rel (0) target = $region17
  $region16: #{residual_attention_block.1} parent=0 // pred_region
    _
  $region17: #{residual_attention_block.1} parent=0 // pred_fallthru
    _
  // Predicated region
  $region18: #{residual_attention_block.1} parent=0 // pred_check
    _
  $region19: #{residual_attention_block.1} parent=0 // pred_check_branch
    %27 = sbr.rel (0) target = $region21
  $region20: #{residual_attention_block.1} parent=0 // pred_region
    _
  $region21: #{residual_attention_block.1} parent=0 // pred_fallthru
    _
  // Predicated region
  $region22: #{residual_attention_block.1} parent=0 // pred_check
    _
  $region23: #{residual_attention_block.1} parent=0 // pred_check_branch
    %29 = sbr.rel (0) target = $region25
  $region24: #{residual_attention_block.1} parent=0 // pred_region
    _
  $region25: #{residual_attention_block.1} parent=0 // pred_fallthru
    _
  // Predicated region
  $region26: #{residual_attention_block.1} parent=0 // pred_check
    _
  $region27: #{residual_attention_block.1} parent=0 // pred_check_branch
    %31 = sbr.rel (0) target = $region29
  $region28: #{residual_attention_block.1} parent=0 // pred_region
    _
  $region29: #{residual_attention_block.1} parent=0 // pred_fallthru
    _
  // Predicated region
  $region30: #{residual_attention_block.1} parent=0 // pred_check
    _
  $region31: #{residual_attention_block.1} parent=0 // pred_check_branch
    %33 = sbr.rel (0) target = $region33
  $region32: #{residual_attention_block.1} parent=0 // pred_region
    _
  $region33: #{residual_attention_block.1} parent=0 // pred_fallthru
    _
  // Predicated region
  $region34: #{residual_attention_block.1} parent=0 // pred_check
    _
  $region35: #{residual_attention_block.1} parent=0 // pred_check_branch
    %35 = sbr.rel (0) target = $region37
  $region36: #{residual_attention_block.1} parent=0 // pred_region
    _
  $region37: #{residual_attention_block.1} parent=0 // pred_fallthru
    _
  // Predicated region
  $region38: #{residual_attention_block.1} parent=0 // pred_check
    _
  $region39: #{residual_attention_block.1} parent=0 // pred_check_branch
    %37 = sbr.rel (0) target = $region41
  $region40: #{residual_attention_block.1} parent=0 // pred_region
    _
  $region41: #{residual_attention_block.1} parent=0 // pred_fallthru
    _
  // Predicated region
  $region42: #{residual_attention_block.1} parent=0 // pred_check
    _
  $region43: #{residual_attention_block.1} parent=0 // pred_check_branch
    %39 = sbr.rel (0) target = $region45
  $region44: #{residual_attention_block.1} parent=0 // pred_region
    _
  $region45: #{residual_attention_block.1} parent=0 // pred_fallthru
    _
  // Predicated region
  $region46: #{residual_attention_block.1} parent=0 // pred_check
    _
  $region47: #{residual_attention_block.1} parent=0 // pred_check_branch
    %41 = sbr.rel (0) target = $region49
  $region48: #{residual_attention_block.1} parent=0 // pred_region
    _
  $region49: #{residual_attention_block.1} parent=0 // pred_fallthru
    _
  // Predicated region
  $region50: #{residual_attention_block.1} parent=0 // pred_check
    _
  $region51: #{residual_attention_block.1} parent=0 // pred_check_branch
    %43 = sbr.rel (0) target = $region53
  $region52: #{residual_attention_block.1} parent=0 // pred_region
    _
  $region53: #{residual_attention_block.1} parent=0 // pred_fallthru
    _
  %v44 = vld [vmem:[%s0] sm:$0xff]
  %v45 = vld [vmem:[%s0 + $0x8] sm:$0xff]
  %v46 = vld [vmem:[%s5] sm:$0x1]
  %v47 = vld [vmem:[%s6] sm:$0x1]
  %vm48 = vcmask 261120
  %v49 = vsel %vm48, %v44, 0.0
  %50 = vadd.xlane.f32.xlu0 %v49
  %v51 = vpop.xlane.xlu0 %50
  %v52 = vsel %vm48, %v45, 0.0
  %53 = vadd.xlane.f32.xlu0 %v52
  %v54 = vpop.xlane.xlu0 %53
  %v55 = vrcp.pop 32.0
  %v56 = vmul.f32 %v51, %v55
  %v57 = vmul.f32 %v54, %v55
  %v58 = vsub.f32 %v44, %v56
  %v59 = vsub.f32 %v45, %v57
  %v60 = vmul.f32 %v58, %v58
  %v61 = vmul.f32 %v59, %v59
  %v62 = vsel %vm48, %v60, 0.0
  %63 = vadd.xlane.f32.xlu0 %v62
  %v64 = vpop.xlane.xlu0 %63
  %v65 = vsel %vm48, %v61, 0.0
  %66 = vadd.xlane.f32.xlu0 %v65
  %v67 = vpop.xlane.xlu0 %66
  %v68 = vmul.f32 %v64, %v55
  %v69 = vmul.f32 %v67, %v55
  %v70 = vadd.f32 %v68, 1e-05
  %v71 = vadd.f32 %v69, 1e-05
  %v72 = vrsqrt.pop %v70
  %v73 = vrsqrt.pop %v71
  %v74 = vmul.f32 %v58, %v72
  %v75 = vmul.f32 %v59, %v73
  %v77 = vlaneseq
  %v78 = vshrl.u32 %v77, 7
  %v79 = vsub.s32 0, %v78
  %v80 = vrot.slane %v46, %v79
  %v82 = vmul.f32 %v74, %v80
  %v83 = vmul.f32 %v75, %v80
  %v85 = vlaneseq
  %v86 = vshrl.u32 %v85, 7
  %v87 = vsub.s32 0, %v86
  %v88 = vrot.slane %v47, %v87
  %v90 = vadd.f32 %v82, %v88
  %v91 = vadd.f32 %v83, %v88
  %v92 = vld [vmem:[%s2] sm:$0xff]
  %v93 = vld [vmem:[%s2 + $0x8] sm:$0xff]
  %v94 = vld [vmem:[%s2 + $0x10] sm:$0xff]
  %v95 = vld [vmem:[%s2 + $0x18] sm:$0xff]
  %v96 = vld [vmem:[%s2 + $0x20] sm:$0xff]
  %v97 = vld [vmem:[%s2 + $0x28] sm:$0xff]
  %v98 = vld [vmem:[%s2 + $0x30] sm:$0xff]
  %v99 = vld [vmem:[%s2 + $0x38] sm:$0xff]
  %v100 = vld [vmem:[%s3] sm:$0x3]
  %v102 = vlaneseq
  %v103 = vshrl.u32 %v102, 7
  %v104 = vsub.s32 0, %v103
  %v105 = vrot.slane %v100, %v104
  %v106 = vlaneseq
  %v107 = vshrl.u32 %v106, 7
  %v108 = vsub.s32 1, %v107
  %v109 = vrot.slane %v100, %v108
  %v113 = vsel %vm48, %v90, 0
  %v116 = vsel %vm48, %v91, 0
  %118 = vmatprep.subr.mxu0 0.0
  %119 = vmatpush1.msra.mxu0 0.0
  %120 = vmatprep.subr.mxu0 0.0
  %121 = vmatpush1.msra.mxu0 0.0
  %122 = vmatprep.subr.mxu0 0.0
  %123 = vmatpush1.msra.mxu0 0.0
  %124 = vmatprep.subr.mxu0 0.0
  %125 = vmatpush1.msra.mxu0 0.0
  %126 = vmatprep.subr.mxu0 0.0
  %127 = vmatpush1.msra.mxu0 0.0
  %128 = vmatprep.subr.mxu0 0.0
  %129 = vmatpush1.msra.mxu0 0.0
  %130 = vmatprep.subr.mxu0 0.0
  %131 = vmatpush1.msra.mxu0 0.0
  %132 = vmatprep.subr.mxu0 0.0
  %133 = vmatpush1.msra.mxu0 0.0
  %134 = vmatprep.subr.mxu0 0.0
  %135 = vmatpush1.msra.mxu0 0.0
  %136 = vmatprep.subr.mxu0 0.0
  %137 = vmatpush1.msra.mxu0 0.0
  %138 = vmatprep.subr.mxu0 0.0
  %139 = vmatpush1.msra.mxu0 0.0
  %140 = vmatprep.subr.mxu0 0.0
  %141 = vmatpush1.msra.mxu0 0.0
  %142 = vmatprep.subr.mxu0 %v99
  %143 = vmatpush1.msra.mxu0 %v98
  %144 = vmatprep.subr.mxu0 %v97
  %145 = vmatpush1.msra.mxu0 %v96
  %146 = vmatprep.subr.mxu0 %v95
  %147 = vmatpush1.msra.mxu0 %v94
  %148 = vmatprep.subr.mxu0 %v93
  %149 = vmatpush1.msra.mxu0 %v92
  %150 = vmatprep.subr.mxu0 0.0
  %151 = vmatpush2.msra.mxu0 0.0
  %152 = vmatprep.subr.mxu0 0.0
  %153 = vmatpush2.msra.mxu0 0.0
  %154 = vmatprep.subr.mxu0 0.0
  %155 = vmatpush2.msra.mxu0 0.0
  %156 = vmatprep.subr.mxu0 0.0
  %157 = vmatpush2.msra.mxu0 0.0
  %158 = vmatprep.subr.mxu0 0.0
  %159 = vmatpush2.msra.mxu0 0.0
  %160 = vmatprep.subr.mxu0 0.0
  %161 = vmatpush2.msra.mxu0 0.0
  %162 = vmatprep.subr.mxu0 0.0
  %163 = vmatpush2.msra.mxu0 0.0
  %164 = vmatprep.subr.mxu0 0.0
  %165 = vmatpush2.msra.mxu0 0.0
  %166 = vmatprep.subr.mxu0 0.0
  %167 = vmatpush2.msra.mxu0 0.0
  %168 = vmatprep.subr.mxu0 0.0
  %169 = vmatpush2.msra.mxu0 0.0
  %170 = vmatprep.subr.mxu0 0.0
  %171 = vmatpush2.msra.mxu0 0.0
  %172 = vmatprep.subr.mxu0 0.0
  %173 = vmatpush2.msra.mxu0 0.0
  %174 = vmatprep.subr.mxu0 0.0
  %175 = vmatpush2.msra.mxu0 0.0
  %176 = vmatprep.subr.mxu0 0.0
  %177 = vmatpush2.msra.mxu0 0.0
  %178 = vmatprep.subr.mxu0 0.0
  %179 = vmatpush2.msra.mxu0 0.0
  %180 = vmatprep.subr.mxu0 0.0
  %181 = vmatpush2.msra.mxu0 0.0
  %182 = vmatprep.mubr.f32.mxu0 0.0
  %183 = vmatmul.mubr.f32.gmra.mxu0 %v113
  %v184 = vpop.f32.mrf.mxu0
  %v185 = vadd.f32 %v105, %v184
  %v186 = vpop.f32.mrf.mxu0
  %v187 = vadd.f32 %v109, %v186
  %188 = vmatprep.mubr.f32.mxu0 0.0
  %189 = vmatmul.mubr.f32.gmra.mxu0 %v116
  %v190 = vpop.f32.mrf.mxu0
  %v191 = vadd.f32 %v105, %v190
  %v192 = vpop.f32.mrf.mxu0
  %v193 = vadd.f32 %v109, %v192
  %194 = vdwg.mxu0
  %v195 = vld [vmem:[%s1] sm:$0xff]
  %197 = vrot.lane.b32.xlu0 %v185, 96
  %v198 = vpop.permute.xlu0 %197
  %vm199 = vcmask 64512
  %v200 = vsel %vm199, %v185, 0
  %v202 = vsel %vm199, %v198, 0
  %204 = vmatprep.subr.mxu0 0.0
  %205 = vmatpush1.xpose.msra.mxu0 0.0
  %206 = vmatprep.subr.mxu0 0.0
  %207 = vmatpush1.xpose.msra.mxu0 0.0
  %208 = vmatprep.subr.mxu0 0.0
  %209 = vmatpush1.xpose.msra.mxu0 0.0
  %210 = vmatprep.subr.mxu0 0.0
  %211 = vmatpush1.xpose.msra.mxu0 0.0
  %212 = vmatprep.subr.mxu0 0.0
  %213 = vmatpush1.xpose.msra.mxu0 0.0
  %214 = vmatprep.subr.mxu0 0.0
  %215 = vmatpush1.xpose.msra.mxu0 0.0
  %216 = vmatprep.subr.mxu0 0.0
  %217 = vmatpush1.xpose.msra.mxu0 0.0
  %218 = vmatprep.subr.mxu0 0.0
  %219 = vmatpush1.xpose.msra.mxu0 0.0
  %220 = vmatprep.subr.mxu0 0.0
  %221 = vmatpush1.xpose.msra.mxu0 0.0
  %222 = vmatprep.subr.mxu0 0.0
  %223 = vmatpush1.xpose.msra.mxu0 0.0
  %224 = vmatprep.subr.mxu0 0.0
  %225 = vmatpush1.xpose.msra.mxu0 0.0
  %226 = vmatprep.subr.mxu0 0.0
  %227 = vmatpush1.xpose.msra.mxu0 0.0
  %228 = vmatprep.subr.mxu0 0.0
  %229 = vmatpush1.xpose.msra.mxu0 0.0
  %230 = vmatprep.subr.mxu0 0.0
  %231 = vmatpush1.xpose.msra.mxu0 0.0
  %232 = vmatprep.subr.mxu0 0.0
  %233 = vmatpush1.xpose.msra.mxu0 0.0
  %234 = vmatprep.subr.mxu0 0.0
  %235 = vmatpush1.xpose.msra.mxu0 %v202
  %236 = vmatprep.subr.mxu0 0.0
  %237 = vmatpush2.xpose.msra.mxu0 0.0
  %238 = vmatprep.subr.mxu0 0.0
  %239 = vmatpush2.xpose.msra.mxu0 0.0
  %240 = vmatprep.subr.mxu0 0.0
  %241 = vmatpush2.xpose.msra.mxu0 0.0
  %242 = vmatprep.subr.mxu0 0.0
  %243 = vmatpush2.xpose.msra.mxu0 0.0
  %244 = vmatprep.subr.mxu0 0.0
  %245 = vmatpush2.xpose.msra.mxu0 0.0
  %246 = vmatprep.subr.mxu0 0.0
  %247 = vmatpush2.xpose.msra.mxu0 0.0
  %248 = vmatprep.subr.mxu0 0.0
  %249 = vmatpush2.xpose.msra.mxu0 0.0
  %250 = vmatprep.subr.mxu0 0.0
  %251 = vmatpush2.xpose.msra.mxu0 0.0
  %252 = vmatprep.subr.mxu0 0.0
  %253 = vmatpush2.xpose.msra.mxu0 0.0
  %254 = vmatprep.subr.mxu0 0.0
  %255 = vmatpush2.xpose.msra.mxu0 0.0
  %256 = vmatprep.subr.mxu0 0.0
  %257 = vmatpush2.xpose.msra.mxu0 0.0
  %258 = vmatprep.subr.mxu0 0.0
  %259 = vmatpush2.xpose.msra.mxu0 0.0
  %260 = vmatprep.subr.mxu0 0.0
  %261 = vmatpush2.xpose.msra.mxu0 0.0
  %262 = vmatprep.subr.mxu0 0.0
  %263 = vmatpush2.xpose.msra.mxu0 0.0
  %264 = vmatprep.subr.mxu0 0.0
  %265 = vmatpush2.xpose.msra.mxu0 0.0
  %266 = vmatprep.subr.mxu0 0.0
  %267 = vmatpush2.xpose.msra.mxu0 0.0
  %268 = vmatprep.mubr.f32.mxu0 0.0
  %269 = vmatmul.mubr.f32.gmra.mxu0 %v200
  %v270 = vpop.f32.mrf.mxu0
  %v271 = vadd.f32 %v195, %v270
  %v272 = vpop.f32.mrf.mxu0
  %273 = vdwg.mxu0
  %v274 = vsel %vm199, %v271, -inf
  %275 = vmax.xlane.f32.xlu0 %v274
  %v276 = vpop.xlane.xlu0 %275
  %v277 = vsub.f32 %v271, %v276
  %v278 = vmul.f32 %v277, 1.442695
  %v279 = vpow.pop %v278
  %v280 = vsel %vm199, %v279, 0.0
  %281 = vadd.xlane.f32.xlu0 %v280
  %v282 = vpop.xlane.xlu0 %281
  %283 = vrot.lane.b32.xlu0 %v185, 64
  %v284 = vpop.permute.xlu0 %283
  %v287 = vsel %vm199, %v279, 0
  %289 = vmatprep.subr.mxu0 0.0
  %290 = vmatpush1.msra.mxu0 0.0
  %291 = vmatprep.subr.mxu0 0.0
  %292 = vmatpush1.msra.mxu0 0.0
  %293 = vmatprep.subr.mxu0 0.0
  %294 = vmatpush1.msra.mxu0 0.0
  %295 = vmatprep.subr.mxu0 0.0
  %296 = vmatpush1.msra.mxu0 0.0
  %297 = vmatprep.subr.mxu0 0.0
  %298 = vmatpush1.msra.mxu0 0.0
  %299 = vmatprep.subr.mxu0 0.0
  %300 = vmatpush1.msra.mxu0 0.0
  %301 = vmatprep.subr.mxu0 0.0
  %302 = vmatpush1.msra.mxu0 0.0
  %303 = vmatprep.subr.mxu0 0.0
  %304 = vmatpush1.msra.mxu0 0.0
  %305 = vmatprep.subr.mxu0 0.0
  %306 = vmatpush1.msra.mxu0 0.0
  %307 = vmatprep.subr.mxu0 0.0
  %308 = vmatpush1.msra.mxu0 0.0
  %309 = vmatprep.subr.mxu0 0.0
  %310 = vmatpush1.msra.mxu0 0.0
  %311 = vmatprep.subr.mxu0 0.0
  %312 = vmatpush1.msra.mxu0 0.0
  %313 = vmatprep.subr.mxu0 0.0
  %314 = vmatpush1.msra.mxu0 0.0
  %315 = vmatprep.subr.mxu0 0.0
  %316 = vmatpush1.msra.mxu0 0.0
  %317 = vmatprep.subr.mxu0 0.0
  %318 = vmatpush1.msra.mxu0 0.0
  %319 = vmatprep.subr.mxu0 0.0
  %320 = vmatpush1.msra.mxu0 %v284
  %321 = vmatprep.subr.mxu0 0.0
  %322 = vmatpush2.msra.mxu0 0.0
  %323 = vmatprep.subr.mxu0 0.0
  %324 = vmatpush2.msra.mxu0 0.0
  %325 = vmatprep.subr.mxu0 0.0
  %326 = vmatpush2.msra.mxu0 0.0
  %327 = vmatprep.subr.mxu0 0.0
  %328 = vmatpush2.msra.mxu0 0.0
  %329 = vmatprep.subr.mxu0 0.0
  %330 = vmatpush2.msra.mxu0 0.0
  %331 = vmatprep.subr.mxu0 0.0
  %332 = vmatpush2.msra.mxu0 0.0
  %333 = vmatprep.subr.mxu0 0.0
  %334 = vmatpush2.msra.mxu0 0.0
  %335 = vmatprep.subr.mxu0 0.0
  %336 = vmatpush2.msra.mxu0 0.0
  %337 = vmatprep.subr.mxu0 0.0
  %338 = vmatpush2.msra.mxu0 0.0
  %339 = vmatprep.subr.mxu0 0.0
  %340 = vmatpush2.msra.mxu0 0.0
  %341 = vmatprep.subr.mxu0 0.0
  %342 = vmatpush2.msra.mxu0 0.0
  %343 = vmatprep.subr.mxu0 0.0
  %344 = vmatpush2.msra.mxu0 0.0
  %345 = vmatprep.subr.mxu0 0.0
  %346 = vmatpush2.msra.mxu0 0.0
  %347 = vmatprep.subr.mxu0 0.0
  %348 = vmatpush2.msra.mxu0 0.0
  %349 = vmatprep.subr.mxu0 0.0
  %350 = vmatpush2.msra.mxu0 0.0
  %351 = vmatprep.subr.mxu0 0.0
  %352 = vmatpush2.msra.mxu0 0.0
  %353 = vmatprep.mubr.f32.mxu0 0.0
  %354 = vmatmul.mubr.f32.gmra.mxu0 %v287
  %v355 = vpop.f32.mrf.mxu0
  %v356 = vadd.f32 0.0, %v355
  %v357 = vpop.f32.mrf.mxu0
  %358 = vdwg.mxu0
  %v359 = vrcp.pop %v282
  %v360 = vmul.f32 %v356, %v359
  %v361 = vadd.f32 %v360, 0.0
  %362 = vrot.lane.b32.xlu0 %v185, 120
  %v363 = vpop.permute.xlu0 %362
  %364 = vrot.lane.b32.xlu0 %v185, 88
  %v365 = vpop.permute.xlu0 %364
  %v366 = vsel %vm199, %v363, 0
  %v368 = vsel %vm199, %v365, 0
  %370 = vmatprep.subr.mxu0 0.0
  %371 = vmatpush1.xpose.msra.mxu0 0.0
  %372 = vmatprep.subr.mxu0 0.0
  %373 = vmatpush1.xpose.msra.mxu0 0.0
  %374 = vmatprep.subr.mxu0 0.0
  %375 = vmatpush1.xpose.msra.mxu0 0.0
  %376 = vmatprep.subr.mxu0 0.0
  %377 = vmatpush1.xpose.msra.mxu0 0.0
  %378 = vmatprep.subr.mxu0 0.0
  %379 = vmatpush1.xpose.msra.mxu0 0.0
  %380 = vmatprep.subr.mxu0 0.0
  %381 = vmatpush1.xpose.msra.mxu0 0.0
  %382 = vmatprep.subr.mxu0 0.0
  %383 = vmatpush1.xpose.msra.mxu0 0.0
  %384 = vmatprep.subr.mxu0 0.0
  %385 = vmatpush1.xpose.msra.mxu0 0.0
  %386 = vmatprep.subr.mxu0 0.0
  %387 = vmatpush1.xpose.msra.mxu0 0.0
  %388 = vmatprep.subr.mxu0 0.0
  %389 = vmatpush1.xpose.msra.mxu0 0.0
  %390 = vmatprep.subr.mxu0 0.0
  %391 = vmatpush1.xpose.msra.mxu0 0.0
  %392 = vmatprep.subr.mxu0 0.0
  %393 = vmatpush1.xpose.msra.mxu0 0.0
  %394 = vmatprep.subr.mxu0 0.0
  %395 = vmatpush1.xpose.msra.mxu0 0.0
  %396 = vmatprep.subr.mxu0 0.0
  %397 = vmatpush1.xpose.msra.mxu0 0.0
  %398 = vmatprep.subr.mxu0 0.0
  %399 = vmatpush1.xpose.msra.mxu0 0.0
  %400 = vmatprep.subr.mxu0 0.0
  %401 = vmatpush1.xpose.msra.mxu0 %v368
  %402 = vmatprep.subr.mxu0 0.0
  %403 = vmatpush2.xpose.msra.mxu0 0.0
  %404 = vmatprep.subr.mxu0 0.0
  %405 = vmatpush2.xpose.msra.mxu0 0.0
  %406 = vmatprep.subr.mxu0 0.0
  %407 = vmatpush2.xpose.msra.mxu0 0.0
  %408 = vmatprep.subr.mxu0 0.0
  %409 = vmatpush2.xpose.msra.mxu0 0.0
  %410 = vmatprep.subr.mxu0 0.0
  %411 = vmatpush2.xpose.msra.mxu0 0.0
  %412 = vmatprep.subr.mxu0 0.0
  %413 = vmatpush2.xpose.msra.mxu0 0.0
  %414 = vmatprep.subr.mxu0 0.0
  %415 = vmatpush2.xpose.msra.mxu0 0.0
  %416 = vmatprep.subr.mxu0 0.0
  %417 = vmatpush2.xpose.msra.mxu0 0.0
  %418 = vmatprep.subr.mxu0 0.0
  %419 = vmatpush2.xpose.msra.mxu0 0.0
  %420 = vmatprep.subr.mxu0 0.0
  %421 = vmatpush2.xpose.msra.mxu0 0.0
  %422 = vmatprep.subr.mxu0 0.0
  %423 = vmatpush2.xpose.msra.mxu0 0.0
  %424 = vmatprep.subr.mxu0 0.0
  %425 = vmatpush2.xpose.msra.mxu0 0.0
  %426 = vmatprep.subr.mxu0 0.0
  %427 = vmatpush2.xpose.msra.mxu0 0.0
  %428 = vmatprep.subr.mxu0 0.0
  %429 = vmatpush2.xpose.msra.mxu0 0.0
  %430 = vmatprep.subr.mxu0 0.0
  %431 = vmatpush2.xpose.msra.mxu0 0.0
  %432 = vmatprep.subr.mxu0 0.0
  %433 = vmatpush2.xpose.msra.mxu0 0.0
  %434 = vmatprep.mubr.f32.mxu0 0.0
  %435 = vmatmul.mubr.f32.gmra.mxu0 %v366
  %v436 = vpop.f32.mrf.mxu0
  %v437 = vadd.f32 %v195, %v436
  %v438 = vpop.f32.mrf.mxu0
  %439 = vdwg.mxu0
  %v440 = vsel %vm199, %v437, -inf
  %441 = vmax.xlane.f32.xlu0 %v440
  %v442 = vpop.xlane.xlu0 %441
  %v443 = vsub.f32 %v437, %v442
  %v444 = vmul.f32 %v443, 1.442695
  %v445 = vpow.pop %v444
  %v446 = vsel %vm199, %v445, 0.0
  %447 = vadd.xlane.f32.xlu0 %v446
  %v448 = vpop.xlane.xlu0 %447
  %449 = vrot.lane.b32.xlu0 %v185, 32
  %v450 = vpop.permute.xlu0 %449
  %v453 = vsel %vm199, %v445, 0
  %455 = vmatprep.subr.mxu0 0.0
  %456 = vmatpush1.msra.mxu0 0.0
  %457 = vmatprep.subr.mxu0 0.0
  %458 = vmatpush1.msra.mxu0 0.0
  %459 = vmatprep.subr.mxu0 0.0
  %460 = vmatpush1.msra.mxu0 0.0
  %461 = vmatprep.subr.mxu0 0.0
  %462 = vmatpush1.msra.mxu0 0.0
  %463 = vmatprep.subr.mxu0 0.0
  %464 = vmatpush1.msra.mxu0 0.0
  %465 = vmatprep.subr.mxu0 0.0
  %466 = vmatpush1.msra.mxu0 0.0
  %467 = vmatprep.subr.mxu0 0.0
  %468 = vmatpush1.msra.mxu0 0.0
  %469 = vmatprep.subr.mxu0 0.0
  %470 = vmatpush1.msra.mxu0 0.0
  %471 = vmatprep.subr.mxu0 0.0
  %472 = vmatpush1.msra.mxu0 0.0
  %473 = vmatprep.subr.mxu0 0.0
  %474 = vmatpush1.msra.mxu0 0.0
  %475 = vmatprep.subr.mxu0 0.0
  %476 = vmatpush1.msra.mxu0 0.0
  %477 = vmatprep.subr.mxu0 0.0
  %478 = vmatpush1.msra.mxu0 0.0
  %479 = vmatprep.subr.mxu0 0.0
  %480 = vmatpush1.msra.mxu0 0.0
  %481 = vmatprep.subr.mxu0 0.0
  %482 = vmatpush1.msra.mxu0 0.0
  %483 = vmatprep.subr.mxu0 0.0
  %484 = vmatpush1.msra.mxu0 0.0
  %485 = vmatprep.subr.mxu0 0.0
  %486 = vmatpush1.msra.mxu0 %v450
  %487 = vmatprep.subr.mxu0 0.0
  %488 = vmatpush2.msra.mxu0 0.0
  %489 = vmatprep.subr.mxu0 0.0
  %490 = vmatpush2.msra.mxu0 0.0
  %491 = vmatprep.subr.mxu0 0.0
  %492 = vmatpush2.msra.mxu0 0.0
  %493 = vmatprep.subr.mxu0 0.0
  %494 = vmatpush2.msra.mxu0 0.0
  %495 = vmatprep.subr.mxu0 0.0
  %496 = vmatpush2.msra.mxu0 0.0
  %497 = vmatprep.subr.mxu0 0.0
  %498 = vmatpush2.msra.mxu0 0.0
  %499 = vmatprep.subr.mxu0 0.0
  %500 = vmatpush2.msra.mxu0 0.0
  %501 = vmatprep.subr.mxu0 0.0
  %502 = vmatpush2.msra.mxu0 0.0
  %503 = vmatprep.subr.mxu0 0.0
  %504 = vmatpush2.msra.mxu0 0.0
  %505 = vmatprep.subr.mxu0 0.0
  %506 = vmatpush2.msra.mxu0 0.0
  %507 = vmatprep.subr.mxu0 0.0
  %508 = vmatpush2.msra.mxu0 0.0
  %509 = vmatprep.subr.mxu0 0.0
  %510 = vmatpush2.msra.mxu0 0.0
  %511 = vmatprep.subr.mxu0 0.0
  %512 = vmatpush2.msra.mxu0 0.0
  %513 = vmatprep.subr.mxu0 0.0
  %514 = vmatpush2.msra.mxu0 0.0
  %515 = vmatprep.subr.mxu0 0.0
  %516 = vmatpush2.msra.mxu0 0.0
  %517 = vmatprep.subr.mxu0 0.0
  %518 = vmatpush2.msra.mxu0 0.0
  %519 = vmatprep.mubr.f32.mxu0 0.0
  %520 = vmatmul.mubr.f32.gmra.mxu0 %v453
  %v521 = vpop.f32.mrf.mxu0
  %v522 = vadd.f32 0.0, %v521
  %v523 = vpop.f32.mrf.mxu0
  %524 = vdwg.mxu0
  %v525 = vrcp.pop %v448
  %v526 = vmul.f32 %v522, %v525
  %v527 = vadd.f32 %v361, %v526
  %528 = vrot.lane.b32.xlu0 %v185, 112
  %v529 = vpop.permute.xlu0 %528
  %530 = vrot.lane.b32.xlu0 %v185, 80
  %v531 = vpop.permute.xlu0 %530
  %v532 = vsel %vm199, %v529, 0
  %v534 = vsel %vm199, %v531, 0
  %536 = vmatprep.subr.mxu0 0.0
  %537 = vmatpush1.xpose.msra.mxu0 0.0
  %538 = vmatprep.subr.mxu0 0.0
  %539 = vmatpush1.xpose.msra.mxu0 0.0
  %540 = vmatprep.subr.mxu0 0.0
  %541 = vmatpush1.xpose.msra.mxu0 0.0
  %542 = vmatprep.subr.mxu0 0.0
  %543 = vmatpush1.xpose.msra.mxu0 0.0
  %544 = vmatprep.subr.mxu0 0.0
  %545 = vmatpush1.xpose.msra.mxu0 0.0
  %546 = vmatprep.subr.mxu0 0.0
  %547 = vmatpush1.xpose.msra.mxu0 0.0
  %548 = vmatprep.subr.mxu0 0.0
  %549 = vmatpush1.xpose.msra.mxu0 0.0
  %550 = vmatprep.subr.mxu0 0.0
  %551 = vmatpush1.xpose.msra.mxu0 0.0
  %552 = vmatprep.subr.mxu0 0.0
  %553 = vmatpush1.xpose.msra.mxu0 0.0
  %554 = vmatprep.subr.mxu0 0.0
  %555 = vmatpush1.xpose.msra.mxu0 0.0
  %556 = vmatprep.subr.mxu0 0.0
  %557 = vmatpush1.xpose.msra.mxu0 0.0
  %558 = vmatprep.subr.mxu0 0.0
  %559 = vmatpush1.xpose.msra.mxu0 0.0
  %560 = vmatprep.subr.mxu0 0.0
  %561 = vmatpush1.xpose.msra.mxu0 0.0
  %562 = vmatprep.subr.mxu0 0.0
  %563 = vmatpush1.xpose.msra.mxu0 0.0
  %564 = vmatprep.subr.mxu0 0.0
  %565 = vmatpush1.xpose.msra.mxu0 0.0
  %566 = vmatprep.subr.mxu0 0.0
  %567 = vmatpush1.xpose.msra.mxu0 %v534
  %568 = vmatprep.subr.mxu0 0.0
  %569 = vmatpush2.xpose.msra.mxu0 0.0
  %570 = vmatprep.subr.mxu0 0.0
  %571 = vmatpush2.xpose.msra.mxu0 0.0
  %572 = vmatprep.subr.mxu0 0.0
  %573 = vmatpush2.xpose.msra.mxu0 0.0
  %574 = vmatprep.subr.mxu0 0.0
  %575 = vmatpush2.xpose.msra.mxu0 0.0
  %576 = vmatprep.subr.mxu0 0.0
  %577 = vmatpush2.xpose.msra.mxu0 0.0
  %578 = vmatprep.subr.mxu0 0.0
  %579 = vmatpush2.xpose.msra.mxu0 0.0
  %580 = vmatprep.subr.mxu0 0.0
  %581 = vmatpush2.xpose.msra.mxu0 0.0
  %582 = vmatprep.subr.mxu0 0.0
  %583 = vmatpush2.xpose.msra.mxu0 0.0
  %584 = vmatprep.subr.mxu0 0.0
  %585 = vmatpush2.xpose.msra.mxu0 0.0
  %586 = vmatprep.subr.mxu0 0.0
  %587 = vmatpush2.xpose.msra.mxu0 0.0
  %588 = vmatprep.subr.mxu0 0.0
  %589 = vmatpush2.xpose.msra.mxu0 0.0
  %590 = vmatprep.subr.mxu0 0.0
  %591 = vmatpush2.xpose.msra.mxu0 0.0
  %592 = vmatprep.subr.mxu0 0.0
  %593 = vmatpush2.xpose.msra.mxu0 0.0
  %594 = vmatprep.subr.mxu0 0.0
  %595 = vmatpush2.xpose.msra.mxu0 0.0
  %596 = vmatprep.subr.mxu0 0.0
  %597 = vmatpush2.xpose.msra.mxu0 0.0
  %598 = vmatprep.subr.mxu0 0.0
  %599 = vmatpush2.xpose.msra.mxu0 0.0
  %600 = vmatprep.mubr.f32.mxu0 0.0
  %601 = vmatmul.mubr.f32.gmra.mxu0 %v532
  %v602 = vpop.f32.mrf.mxu0
  %v603 = vadd.f32 %v195, %v602
  %v604 = vpop.f32.mrf.mxu0
  %605 = vdwg.mxu0
  %v606 = vsel %vm199, %v603, -inf
  %607 = vmax.xlane.f32.xlu0 %v606
  %v608 = vpop.xlane.xlu0 %607
  %v609 = vsub.f32 %v603, %v608
  %v610 = vmul.f32 %v609, 1.442695
  %v611 = vpow.pop %v610
  %v612 = vsel %vm199, %v611, 0.0
  %613 = vadd.xlane.f32.xlu0 %v612
  %v614 = vpop.xlane.xlu0 %613
  %v616 = vsel %vm199, %v611, 0
  %618 = vmatprep.subr.mxu0 0.0
  %619 = vmatpush1.msra.mxu0 0.0
  %620 = vmatprep.subr.mxu0 0.0
  %621 = vmatpush1.msra.mxu0 0.0
  %622 = vmatprep.subr.mxu0 0.0
  %623 = vmatpush1.msra.mxu0 0.0
  %624 = vmatprep.subr.mxu0 0.0
  %625 = vmatpush1.msra.mxu0 0.0
  %626 = vmatprep.subr.mxu0 0.0
  %627 = vmatpush1.msra.mxu0 0.0
  %628 = vmatprep.subr.mxu0 0.0
  %629 = vmatpush1.msra.mxu0 0.0
  %630 = vmatprep.subr.mxu0 0.0
  %631 = vmatpush1.msra.mxu0 0.0
  %632 = vmatprep.subr.mxu0 0.0
  %633 = vmatpush1.msra.mxu0 0.0
  %634 = vmatprep.subr.mxu0 0.0
  %635 = vmatpush1.msra.mxu0 0.0
  %636 = vmatprep.subr.mxu0 0.0
  %637 = vmatpush1.msra.mxu0 0.0
  %638 = vmatprep.subr.mxu0 0.0
  %639 = vmatpush1.msra.mxu0 0.0
  %640 = vmatprep.subr.mxu0 0.0
  %641 = vmatpush1.msra.mxu0 0.0
  %642 = vmatprep.subr.mxu0 0.0
  %643 = vmatpush1.msra.mxu0 0.0
  %644 = vmatprep.subr.mxu0 0.0
  %645 = vmatpush1.msra.mxu0 0.0
  %646 = vmatprep.subr.mxu0 0.0
  %647 = vmatpush1.msra.mxu0 0.0
  %648 = vmatprep.subr.mxu0 0.0
  %649 = vmatpush1.msra.mxu0 %v187
  %650 = vmatprep.subr.mxu0 0.0
  %651 = vmatpush2.msra.mxu0 0.0
  %652 = vmatprep.subr.mxu0 0.0
  %653 = vmatpush2.msra.mxu0 0.0
  %654 = vmatprep.subr.mxu0 0.0
  %655 = vmatpush2.msra.mxu0 0.0
  %656 = vmatprep.subr.mxu0 0.0
  %657 = vmatpush2.msra.mxu0 0.0
  %658 = vmatprep.subr.mxu0 0.0
  %659 = vmatpush2.msra.mxu0 0.0
  %660 = vmatprep.subr.mxu0 0.0
  %661 = vmatpush2.msra.mxu0 0.0
  %662 = vmatprep.subr.mxu0 0.0
  %663 = vmatpush2.msra.mxu0 0.0
  %664 = vmatprep.subr.mxu0 0.0
  %665 = vmatpush2.msra.mxu0 0.0
  %666 = vmatprep.subr.mxu0 0.0
  %667 = vmatpush2.msra.mxu0 0.0
  %668 = vmatprep.subr.mxu0 0.0
  %669 = vmatpush2.msra.mxu0 0.0
  %670 = vmatprep.subr.mxu0 0.0
  %671 = vmatpush2.msra.mxu0 0.0
  %672 = vmatprep.subr.mxu0 0.0
  %673 = vmatpush2.msra.mxu0 0.0
  %674 = vmatprep.subr.mxu0 0.0
  %675 = vmatpush2.msra.mxu0 0.0
  %676 = vmatprep.subr.mxu0 0.0
  %677 = vmatpush2.msra.mxu0 0.0
  %678 = vmatprep.subr.mxu0 0.0
  %679 = vmatpush2.msra.mxu0 0.0
  %680 = vmatprep.subr.mxu0 0.0
  %681 = vmatpush2.msra.mxu0 0.0
  %682 = vmatprep.mubr.f32.mxu0 0.0
  %683 = vmatmul.mubr.f32.gmra.mxu0 %v616
  %v684 = vpop.f32.mrf.mxu0
  %v685 = vadd.f32 0.0, %v684
  %v686 = vpop.f32.mrf.mxu0
  %687 = vdwg.mxu0
  %v688 = vrcp.pop %v614
  %v689 = vmul.f32 %v685, %v688
  %v690 = vadd.f32 %v527, %v689
  %691 = vrot.lane.b32.xlu0 %v185, 104
  %v692 = vpop.permute.xlu0 %691
  %693 = vrot.lane.b32.xlu0 %v185, 72
  %v694 = vpop.permute.xlu0 %693
  %v695 = vsel %vm199, %v692, 0
  %v697 = vsel %vm199, %v694, 0
  %699 = vmatprep.subr.mxu0 0.0
  %700 = vmatpush1.xpose.msra.mxu0 0.0
  %701 = vmatprep.subr.mxu0 0.0
  %702 = vmatpush1.xpose.msra.mxu0 0.0
  %703 = vmatprep.subr.mxu0 0.0
  %704 = vmatpush1.xpose.msra.mxu0 0.0
  %705 = vmatprep.subr.mxu0 0.0
  %706 = vmatpush1.xpose.msra.mxu0 0.0
  %707 = vmatprep.subr.mxu0 0.0
  %708 = vmatpush1.xpose.msra.mxu0 0.0
  %709 = vmatprep.subr.mxu0 0.0
  %710 = vmatpush1.xpose.msra.mxu0 0.0
  %711 = vmatprep.subr.mxu0 0.0
  %712 = vmatpush1.xpose.msra.mxu0 0.0
  %713 = vmatprep.subr.mxu0 0.0
  %714 = vmatpush1.xpose.msra.mxu0 0.0
  %715 = vmatprep.subr.mxu0 0.0
  %716 = vmatpush1.xpose.msra.mxu0 0.0
  %717 = vmatprep.subr.mxu0 0.0
  %718 = vmatpush1.xpose.msra.mxu0 0.0
  %719 = vmatprep.subr.mxu0 0.0
  %720 = vmatpush1.xpose.msra.mxu0 0.0
  %721 = vmatprep.subr.mxu0 0.0
  %722 = vmatpush1.xpose.msra.mxu0 0.0
  %723 = vmatprep.subr.mxu0 0.0
  %724 = vmatpush1.xpose.msra.mxu0 0.0
  %725 = vmatprep.subr.mxu0 0.0
  %726 = vmatpush1.xpose.msra.mxu0 0.0
  %727 = vmatprep.subr.mxu0 0.0
  %728 = vmatpush1.xpose.msra.mxu0 0.0
  %729 = vmatprep.subr.mxu0 0.0
  %730 = vmatpush1.xpose.msra.mxu0 %v697
  %731 = vmatprep.subr.mxu0 0.0
  %732 = vmatpush2.xpose.msra.mxu0 0.0
  %733 = vmatprep.subr.mxu0 0.0
  %734 = vmatpush2.xpose.msra.mxu0 0.0
  %735 = vmatprep.subr.mxu0 0.0
  %736 = vmatpush2.xpose.msra.mxu0 0.0
  %737 = vmatprep.subr.mxu0 0.0
  %738 = vmatpush2.xpose.msra.mxu0 0.0
  %739 = vmatprep.subr.mxu0 0.0
  %740 = vmatpush2.xpose.msra.mxu0 0.0
  %741 = vmatprep.subr.mxu0 0.0
  %742 = vmatpush2.xpose.msra.mxu0 0.0
  %743 = vmatprep.subr.mxu0 0.0
  %744 = vmatpush2.xpose.msra.mxu0 0.0
  %745 = vmatprep.subr.mxu0 0.0
  %746 = vmatpush2.xpose.msra.mxu0 0.0
  %747 = vmatprep.subr.mxu0 0.0
  %748 = vmatpush2.xpose.msra.mxu0 0.0
  %749 = vmatprep.subr.mxu0 0.0
  %750 = vmatpush2.xpose.msra.mxu0 0.0
  %751 = vmatprep.subr.mxu0 0.0
  %752 = vmatpush2.xpose.msra.mxu0 0.0
  %753 = vmatprep.subr.mxu0 0.0
  %754 = vmatpush2.xpose.msra.mxu0 0.0
  %755 = vmatprep.subr.mxu0 0.0
  %756 = vmatpush2.xpose.msra.mxu0 0.0
  %757 = vmatprep.subr.mxu0 0.0
  %758 = vmatpush2.xpose.msra.mxu0 0.0
  %759 = vmatprep.subr.mxu0 0.0
  %760 = vmatpush2.xpose.msra.mxu0 0.0
  %761 = vmatprep.subr.mxu0 0.0
  %762 = vmatpush2.xpose.msra.mxu0 0.0
  %763 = vmatprep.mubr.f32.mxu0 0.0
  %764 = vmatmul.mubr.f32.gmra.mxu0 %v695
  %v765 = vpop.f32.mrf.mxu0
  %v766 = vadd.f32 %v195, %v765
  %v767 = vpop.f32.mrf.mxu0
  %768 = vdwg.mxu0
  %v769 = vsel %vm199, %v766, -inf
  %770 = vmax.xlane.f32.xlu0 %v769
  %v771 = vpop.xlane.xlu0 %770
  %v772 = vsub.f32 %v766, %v771
  %v773 = vmul.f32 %v772, 1.442695
  %v774 = vpow.pop %v773
  %v775 = vsel %vm199, %v774, 0.0
  %776 = vadd.xlane.f32.xlu0 %v775
  %v777 = vpop.xlane.xlu0 %776
  %779 = vrot.lane.b32.xlu0 %v187, 96
  %v780 = vpop.permute.xlu0 %779
  %v783 = vsel %vm199, %v774, 0
  %785 = vmatprep.subr.mxu0 0.0
  %786 = vmatpush1.msra.mxu0 0.0
  %787 = vmatprep.subr.mxu0 0.0
  %788 = vmatpush1.msra.mxu0 0.0
  %789 = vmatprep.subr.mxu0 0.0
  %790 = vmatpush1.msra.mxu0 0.0
  %791 = vmatprep.subr.mxu0 0.0
  %792 = vmatpush1.msra.mxu0 0.0
  %793 = vmatprep.subr.mxu0 0.0
  %794 = vmatpush1.msra.mxu0 0.0
  %795 = vmatprep.subr.mxu0 0.0
  %796 = vmatpush1.msra.mxu0 0.0
  %797 = vmatprep.subr.mxu0 0.0
  %798 = vmatpush1.msra.mxu0 0.0
  %799 = vmatprep.subr.mxu0 0.0
  %800 = vmatpush1.msra.mxu0 0.0
  %801 = vmatprep.subr.mxu0 0.0
  %802 = vmatpush1.msra.mxu0 0.0
  %803 = vmatprep.subr.mxu0 0.0
  %804 = vmatpush1.msra.mxu0 0.0
  %805 = vmatprep.subr.mxu0 0.0
  %806 = vmatpush1.msra.mxu0 0.0
  %807 = vmatprep.subr.mxu0 0.0
  %808 = vmatpush1.msra.mxu0 0.0
  %809 = vmatprep.subr.mxu0 0.0
  %810 = vmatpush1.msra.mxu0 0.0
  %811 = vmatprep.subr.mxu0 0.0
  %812 = vmatpush1.msra.mxu0 0.0
  %813 = vmatprep.subr.mxu0 0.0
  %814 = vmatpush1.msra.mxu0 0.0
  %815 = vmatprep.subr.mxu0 0.0
  %816 = vmatpush1.msra.mxu0 %v780
  %817 = vmatprep.subr.mxu0 0.0
  %818 = vmatpush2.msra.mxu0 0.0
  %819 = vmatprep.subr.mxu0 0.0
  %820 = vmatpush2.msra.mxu0 0.0
  %821 = vmatprep.subr.mxu0 0.0
  %822 = vmatpush2.msra.mxu0 0.0
  %823 = vmatprep.subr.mxu0 0.0
  %824 = vmatpush2.msra.mxu0 0.0
  %825 = vmatprep.subr.mxu0 0.0
  %826 = vmatpush2.msra.mxu0 0.0
  %827 = vmatprep.subr.mxu0 0.0
  %828 = vmatpush2.msra.mxu0 0.0
  %829 = vmatprep.subr.mxu0 0.0
  %830 = vmatpush2.msra.mxu0 0.0
  %831 = vmatprep.subr.mxu0 0.0
  %832 = vmatpush2.msra.mxu0 0.0
  %833 = vmatprep.subr.mxu0 0.0
  %834 = vmatpush2.msra.mxu0 0.0
  %835 = vmatprep.subr.mxu0 0.0
  %836 = vmatpush2.msra.mxu0 0.0
  %837 = vmatprep.subr.mxu0 0.0
  %838 = vmatpush2.msra.mxu0 0.0
  %839 = vmatprep.subr.mxu0 0.0
  %840 = vmatpush2.msra.mxu0 0.0
  %841 = vmatprep.subr.mxu0 0.0
  %842 = vmatpush2.msra.mxu0 0.0
  %843 = vmatprep.subr.mxu0 0.0
  %844 = vmatpush2.msra.mxu0 0.0
  %845 = vmatprep.subr.mxu0 0.0
  %846 = vmatpush2.msra.mxu0 0.0
  %847 = vmatprep.subr.mxu0 0.0
  %848 = vmatpush2.msra.mxu0 0.0
  %849 = vmatprep.mubr.f32.mxu0 0.0
  %850 = vmatmul.mubr.f32.gmra.mxu0 %v783
  %v851 = vpop.f32.mrf.mxu0
  %v852 = vadd.f32 0.0, %v851
  %v853 = vpop.f32.mrf.mxu0
  %854 = vdwg.mxu0
  %v855 = vrcp.pop %v777
  %v856 = vmul.f32 %v852, %v855
  %v857 = vadd.f32 %v690, %v856
  %s858 = scalar_lea.vmem %s1, 8
  %v859 = vld [vmem:[%s858] sm:$0xff]
  %861 = vrot.lane.b32.xlu0 %v191, 96
  %v862 = vpop.permute.xlu0 %861
  %v863 = vsel %vm199, %v191, 0
  %v865 = vsel %vm199, %v862, 0
  %867 = vmatprep.subr.mxu0 0.0
  %868 = vmatpush1.xpose.msra.mxu0 0.0
  %869 = vmatprep.subr.mxu0 0.0
  %870 = vmatpush1.xpose.msra.mxu0 0.0
  %871 = vmatprep.subr.mxu0 0.0
  %872 = vmatpush1.xpose.msra.mxu0 0.0
  %873 = vmatprep.subr.mxu0 0.0
  %874 = vmatpush1.xpose.msra.mxu0 0.0
  %875 = vmatprep.subr.mxu0 0.0
  %876 = vmatpush1.xpose.msra.mxu0 0.0
  %877 = vmatprep.subr.mxu0 0.0
  %878 = vmatpush1.xpose.msra.mxu0 0.0
  %879 = vmatprep.subr.mxu0 0.0
  %880 = vmatpush1.xpose.msra.mxu0 0.0
  %881 = vmatprep.subr.mxu0 0.0
  %882 = vmatpush1.xpose.msra.mxu0 0.0
  %883 = vmatprep.subr.mxu0 0.0
  %884 = vmatpush1.xpose.msra.mxu0 0.0
  %885 = vmatprep.subr.mxu0 0.0
  %886 = vmatpush1.xpose.msra.mxu0 0.0
  %887 = vmatprep.subr.mxu0 0.0
  %888 = vmatpush1.xpose.msra.mxu0 0.0
  %889 = vmatprep.subr.mxu0 0.0
  %890 = vmatpush1.xpose.msra.mxu0 0.0
  %891 = vmatprep.subr.mxu0 0.0
  %892 = vmatpush1.xpose.msra.mxu0 0.0
  %893 = vmatprep.subr.mxu0 0.0
  %894 = vmatpush1.xpose.msra.mxu0 0.0
  %895 = vmatprep.subr.mxu0 0.0
  %896 = vmatpush1.xpose.msra.mxu0 0.0
  %897 = vmatprep.subr.mxu0 0.0
  %898 = vmatpush1.xpose.msra.mxu0 %v865
  %899 = vmatprep.subr.mxu0 0.0
  %900 = vmatpush2.xpose.msra.mxu0 0.0
  %901 = vmatprep.subr.mxu0 0.0
  %902 = vmatpush2.xpose.msra.mxu0 0.0
  %903 = vmatprep.subr.mxu0 0.0
  %904 = vmatpush2.xpose.msra.mxu0 0.0
  %905 = vmatprep.subr.mxu0 0.0
  %906 = vmatpush2.xpose.msra.mxu0 0.0
  %907 = vmatprep.subr.mxu0 0.0
  %908 = vmatpush2.xpose.msra.mxu0 0.0
  %909 = vmatprep.subr.mxu0 0.0
  %910 = vmatpush2.xpose.msra.mxu0 0.0
  %911 = vmatprep.subr.mxu0 0.0
  %912 = vmatpush2.xpose.msra.mxu0 0.0
  %913 = vmatprep.subr.mxu0 0.0
  %914 = vmatpush2.xpose.msra.mxu0 0.0
  %915 = vmatprep.subr.mxu0 0.0
  %916 = vmatpush2.xpose.msra.mxu0 0.0
  %917 = vmatprep.subr.mxu0 0.0
  %918 = vmatpush2.xpose.msra.mxu0 0.0
  %919 = vmatprep.subr.mxu0 0.0
  %920 = vmatpush2.xpose.msra.mxu0 0.0
  %921 = vmatprep.subr.mxu0 0.0
  %922 = vmatpush2.xpose.msra.mxu0 0.0
  %923 = vmatprep.subr.mxu0 0.0
  %924 = vmatpush2.xpose.msra.mxu0 0.0
  %925 = vmatprep.subr.mxu0 0.0
  %926 = vmatpush2.xpose.msra.mxu0 0.0
  %927 = vmatprep.subr.mxu0 0.0
  %928 = vmatpush2.xpose.msra.mxu0 0.0
  %929 = vmatprep.subr.mxu0 0.0
  %930 = vmatpush2.xpose.msra.mxu0 0.0
  %931 = vmatprep.mubr.f32.mxu0 0.0
  %932 = vmatmul.mubr.f32.gmra.mxu0 %v863
  %v933 = vpop.f32.mrf.mxu0
  %v934 = vadd.f32 %v859, %v933
  %v935 = vpop.f32.mrf.mxu0
  %936 = vdwg.mxu0
  %v937 = vsel %vm199, %v934, -inf
  %938 = vmax.xlane.f32.xlu0 %v937
  %v939 = vpop.xlane.xlu0 %938
  %v940 = vsub.f32 %v934, %v939
  %v941 = vmul.f32 %v940, 1.442695
  %v942 = vpow.pop %v941
  %v943 = vsel %vm199, %v942, 0.0
  %944 = vadd.xlane.f32.xlu0 %v943
  %v945 = vpop.xlane.xlu0 %944
  %946 = vrot.lane.b32.xlu0 %v191, 64
  %v947 = vpop.permute.xlu0 %946
  %v950 = vsel %vm199, %v942, 0
  %952 = vmatprep.subr.mxu0 0.0
  %953 = vmatpush1.msra.mxu0 0.0
  %954 = vmatprep.subr.mxu0 0.0
  %955 = vmatpush1.msra.mxu0 0.0
  %956 = vmatprep.subr.mxu0 0.0
  %957 = vmatpush1.msra.mxu0 0.0
  %958 = vmatprep.subr.mxu0 0.0
  %959 = vmatpush1.msra.mxu0 0.0
  %960 = vmatprep.subr.mxu0 0.0
  %961 = vmatpush1.msra.mxu0 0.0
  %962 = vmatprep.subr.mxu0 0.0
  %963 = vmatpush1.msra.mxu0 0.0
  %964 = vmatprep.subr.mxu0 0.0
  %965 = vmatpush1.msra.mxu0 0.0
  %966 = vmatprep.subr.mxu0 0.0
  %967 = vmatpush1.msra.mxu0 0.0
  %968 = vmatprep.subr.mxu0 0.0
  %969 = vmatpush1.msra.mxu0 0.0
  %970 = vmatprep.subr.mxu0 0.0
  %971 = vmatpush1.msra.mxu0 0.0
  %972 = vmatprep.subr.mxu0 0.0
  %973 = vmatpush1.msra.mxu0 0.0
  %974 = vmatprep.subr.mxu0 0.0
  %975 = vmatpush1.msra.mxu0 0.0
  %976 = vmatprep.subr.mxu0 0.0
  %977 = vmatpush1.msra.mxu0 0.0
  %978 = vmatprep.subr.mxu0 0.0
  %979 = vmatpush1.msra.mxu0 0.0
  %980 = vmatprep.subr.mxu0 0.0
  %981 = vmatpush1.msra.mxu0 0.0
  %982 = vmatprep.subr.mxu0 0.0
  %983 = vmatpush1.msra.mxu0 %v947
  %984 = vmatprep.subr.mxu0 0.0
  %985 = vmatpush2.msra.mxu0 0.0
  %986 = vmatprep.subr.mxu0 0.0
  %987 = vmatpush2.msra.mxu0 0.0
  %988 = vmatprep.subr.mxu0 0.0
  %989 = vmatpush2.msra.mxu0 0.0
  %990 = vmatprep.subr.mxu0 0.0
  %991 = vmatpush2.msra.mxu0 0.0
  %992 = vmatprep.subr.mxu0 0.0
  %993 = vmatpush2.msra.mxu0 0.0
  %994 = vmatprep.subr.mxu0 0.0
  %995 = vmatpush2.msra.mxu0 0.0
  %996 = vmatprep.subr.mxu0 0.0
  %997 = vmatpush2.msra.mxu0 0.0
  %998 = vmatprep.subr.mxu0 0.0
  %999 = vmatpush2.msra.mxu0 0.0
  %1000 = vmatprep.subr.mxu0 0.0
  %1001 = vmatpush2.msra.mxu0 0.0
  %1002 = vmatprep.subr.mxu0 0.0
  %1003 = vmatpush2.msra.mxu0 0.0
  %1004 = vmatprep.subr.mxu0 0.0
  %1005 = vmatpush2.msra.mxu0 0.0
  %1006 = vmatprep.subr.mxu0 0.0
  %1007 = vmatpush2.msra.mxu0 0.0
  %1008 = vmatprep.subr.mxu0 0.0
  %1009 = vmatpush2.msra.mxu0 0.0
  %1010 = vmatprep.subr.mxu0 0.0
  %1011 = vmatpush2.msra.mxu0 0.0
  %1012 = vmatprep.subr.mxu0 0.0
  %1013 = vmatpush2.msra.mxu0 0.0
  %1014 = vmatprep.subr.mxu0 0.0
  %1015 = vmatpush2.msra.mxu0 0.0
  %1016 = vmatprep.mubr.f32.mxu0 0.0
  %1017 = vmatmul.mubr.f32.gmra.mxu0 %v950
  %v1018 = vpop.f32.mrf.mxu0
  %v1019 = vadd.f32 0.0, %v1018
  %v1020 = vpop.f32.mrf.mxu0
  %1021 = vdwg.mxu0
  %v1022 = vrcp.pop %v945
  %v1023 = vmul.f32 %v1019, %v1022
  %v1024 = vadd.f32 %v1023, 0.0
  %1025 = vrot.lane.b32.xlu0 %v191, 120
  %v1026 = vpop.permute.xlu0 %1025
  %1027 = vrot.lane.b32.xlu0 %v191, 88
  %v1028 = vpop.permute.xlu0 %1027
  %v1029 = vsel %vm199, %v1026, 0
  %v1031 = vsel %vm199, %v1028, 0
  %1033 = vmatprep.subr.mxu0 0.0
  %1034 = vmatpush1.xpose.msra.mxu0 0.0
  %1035 = vmatprep.subr.mxu0 0.0
  %1036 = vmatpush1.xpose.msra.mxu0 0.0
  %1037 = vmatprep.subr.mxu0 0.0
  %1038 = vmatpush1.xpose.msra.mxu0 0.0
  %1039 = vmatprep.subr.mxu0 0.0
  %1040 = vmatpush1.xpose.msra.mxu0 0.0
  %1041 = vmatprep.subr.mxu0 0.0
  %1042 = vmatpush1.xpose.msra.mxu0 0.0
  %1043 = vmatprep.subr.mxu0 0.0
  %1044 = vmatpush1.xpose.msra.mxu0 0.0
  %1045 = vmatprep.subr.mxu0 0.0
  %1046 = vmatpush1.xpose.msra.mxu0 0.0
  %1047 = vmatprep.subr.mxu0 0.0
  %1048 = vmatpush1.xpose.msra.mxu0 0.0
  %1049 = vmatprep.subr.mxu0 0.0
  %1050 = vmatpush1.xpose.msra.mxu0 0.0
  %1051 = vmatprep.subr.mxu0 0.0
  %1052 = vmatpush1.xpose.msra.mxu0 0.0
  %1053 = vmatprep.subr.mxu0 0.0
  %1054 = vmatpush1.xpose.msra.mxu0 0.0
  %1055 = vmatprep.subr.mxu0 0.0
  %1056 = vmatpush1.xpose.msra.mxu0 0.0
  %1057 = vmatprep.subr.mxu0 0.0
  %1058 = vmatpush1.xpose.msra.mxu0 0.0
  %1059 = vmatprep.subr.mxu0 0.0
  %1060 = vmatpush1.xpose.msra.mxu0 0.0
  %1061 = vmatprep.subr.mxu0 0.0
  %1062 = vmatpush1.xpose.msra.mxu0 0.0
  %1063 = vmatprep.subr.mxu0 0.0
  %1064 = vmatpush1.xpose.msra.mxu0 %v1031
  %1065 = vmatprep.subr.mxu0 0.0
  %1066 = vmatpush2.xpose.msra.mxu0 0.0
  %1067 = vmatprep.subr.mxu0 0.0
  %1068 = vmatpush2.xpose.msra.mxu0 0.0
  %1069 = vmatprep.subr.mxu0 0.0
  %1070 = vmatpush2.xpose.msra.mxu0 0.0
  %1071 = vmatprep.subr.mxu0 0.0
  %1072 = vmatpush2.xpose.msra.mxu0 0.0
  %1073 = vmatprep.subr.mxu0 0.0
  %1074 = vmatpush2.xpose.msra.mxu0 0.0
  %1075 = vmatprep.subr.mxu0 0.0
  %1076 = vmatpush2.xpose.msra.mxu0 0.0
  %1077 = vmatprep.subr.mxu0 0.0
  %1078 = vmatpush2.xpose.msra.mxu0 0.0
  %1079 = vmatprep.subr.mxu0 0.0
  %1080 = vmatpush2.xpose.msra.mxu0 0.0
  %1081 = vmatprep.subr.mxu0 0.0
  %1082 = vmatpush2.xpose.msra.mxu0 0.0
  %1083 = vmatprep.subr.mxu0 0.0
  %1084 = vmatpush2.xpose.msra.mxu0 0.0
  %1085 = vmatprep.subr.mxu0 0.0
  %1086 = vmatpush2.xpose.msra.mxu0 0.0
  %1087 = vmatprep.subr.mxu0 0.0
  %1088 = vmatpush2.xpose.msra.mxu0 0.0
  %1089 = vmatprep.subr.mxu0 0.0
  %1090 = vmatpush2.xpose.msra.mxu0 0.0
  %1091 = vmatprep.subr.mxu0 0.0
  %1092 = vmatpush2.xpose.msra.mxu0 0.0
  %1093 = vmatprep.subr.mxu0 0.0
  %1094 = vmatpush2.xpose.msra.mxu0 0.0
  %1095 = vmatprep.subr.mxu0 0.0
  %1096 = vmatpush2.xpose.msra.mxu0 0.0
  %1097 = vmatprep.mubr.f32.mxu0 0.0
  %1098 = vmatmul.mubr.f32.gmra.mxu0 %v1029
  %v1099 = vpop.f32.mrf.mxu0
  %v1100 = vadd.f32 %v859, %v1099
  %v1101 = vpop.f32.mrf.mxu0
  %1102 = vdwg.mxu0
  %v1103 = vsel %vm199, %v1100, -inf
  %1104 = vmax.xlane.f32.xlu0 %v1103
  %v1105 = vpop.xlane.xlu0 %1104
  %v1106 = vsub.f32 %v1100, %v1105
  %v1107 = vmul.f32 %v1106, 1.442695
  %v1108 = vpow.pop %v1107
  %v1109 = vsel %vm199, %v1108, 0.0
  %1110 = vadd.xlane.f32.xlu0 %v1109
  %v1111 = vpop.xlane.xlu0 %1110
  %1112 = vrot.lane.b32.xlu0 %v191, 32
  %v1113 = vpop.permute.xlu0 %1112
  %v1116 = vsel %vm199, %v1108, 0
  %1118 = vmatprep.subr.mxu0 0.0
  %1119 = vmatpush1.msra.mxu0 0.0
  %1120 = vmatprep.subr.mxu0 0.0
  %1121 = vmatpush1.msra.mxu0 0.0
  %1122 = vmatprep.subr.mxu0 0.0
  %1123 = vmatpush1.msra.mxu0 0.0
  %1124 = vmatprep.subr.mxu0 0.0
  %1125 = vmatpush1.msra.mxu0 0.0
  %1126 = vmatprep.subr.mxu0 0.0
  %1127 = vmatpush1.msra.mxu0 0.0
  %1128 = vmatprep.subr.mxu0 0.0
  %1129 = vmatpush1.msra.mxu0 0.0
  %1130 = vmatprep.subr.mxu0 0.0
  %1131 = vmatpush1.msra.mxu0 0.0
  %1132 = vmatprep.subr.mxu0 0.0
  %1133 = vmatpush1.msra.mxu0 0.0
  %1134 = vmatprep.subr.mxu0 0.0
  %1135 = vmatpush1.msra.mxu0 0.0
  %1136 = vmatprep.subr.mxu0 0.0
  %1137 = vmatpush1.msra.mxu0 0.0
  %1138 = vmatprep.subr.mxu0 0.0
  %1139 = vmatpush1.msra.mxu0 0.0
  %1140 = vmatprep.subr.mxu0 0.0
  %1141 = vmatpush1.msra.mxu0 0.0
  %1142 = vmatprep.subr.mxu0 0.0
  %1143 = vmatpush1.msra.mxu0 0.0
  %1144 = vmatprep.subr.mxu0 0.0
  %1145 = vmatpush1.msra.mxu0 0.0
  %1146 = vmatprep.subr.mxu0 0.0
  %1147 = vmatpush1.msra.mxu0 0.0
  %1148 = vmatprep.subr.mxu0 0.0
  %1149 = vmatpush1.msra.mxu0 %v1113
  %1150 = vmatprep.subr.mxu0 0.0
  %1151 = vmatpush2.msra.mxu0 0.0
  %1152 = vmatprep.subr.mxu0 0.0
  %1153 = vmatpush2.msra.mxu0 0.0
  %1154 = vmatprep.subr.mxu0 0.0
  %1155 = vmatpush2.msra.mxu0 0.0
  %1156 = vmatprep.subr.mxu0 0.0
  %1157 = vmatpush2.msra.mxu0 0.0
  %1158 = vmatprep.subr.mxu0 0.0
  %1159 = vmatpush2.msra.mxu0 0.0
  %1160 = vmatprep.subr.mxu0 0.0
  %1161 = vmatpush2.msra.mxu0 0.0
  %1162 = vmatprep.subr.mxu0 0.0
  %1163 = vmatpush2.msra.mxu0 0.0
  %1164 = vmatprep.subr.mxu0 0.0
  %1165 = vmatpush2.msra.mxu0 0.0
  %1166 = vmatprep.subr.mxu0 0.0
  %1167 = vmatpush2.msra.mxu0 0.0
  %1168 = vmatprep.subr.mxu0 0.0
  %1169 = vmatpush2.msra.mxu0 0.0
  %1170 = vmatprep.subr.mxu0 0.0
  %1171 = vmatpush2.msra.mxu0 0.0
  %1172 = vmatprep.subr.mxu0 0.0
  %1173 = vmatpush2.msra.mxu0 0.0
  %1174 = vmatprep.subr.mxu0 0.0
  %1175 = vmatpush2.msra.mxu0 0.0
  %1176 = vmatprep.subr.mxu0 0.0
  %1177 = vmatpush2.msra.mxu0 0.0
  %1178 = vmatprep.subr.mxu0 0.0
  %1179 = vmatpush2.msra.mxu0 0.0
  %1180 = vmatprep.subr.mxu0 0.0
  %1181 = vmatpush2.msra.mxu0 0.0
  %1182 = vmatprep.mubr.f32.mxu0 0.0
  %1183 = vmatmul.mubr.f32.gmra.mxu0 %v1116
  %v1184 = vpop.f32.mrf.mxu0
  %v1185 = vadd.f32 0.0, %v1184
  %v1186 = vpop.f32.mrf.mxu0
  %1187 = vdwg.mxu0
  %v1188 = vrcp.pop %v1111
  %v1189 = vmul.f32 %v1185, %v1188
  %v1190 = vadd.f32 %v1024, %v1189
  %1191 = vrot.lane.b32.xlu0 %v191, 112
  %v1192 = vpop.permute.xlu0 %1191
  %1193 = vrot.lane.b32.xlu0 %v191, 80
  %v1194 = vpop.permute.xlu0 %1193
  %v1195 = vsel %vm199, %v1192, 0
  %v1197 = vsel %vm199, %v1194, 0
  %1199 = vmatprep.subr.mxu0 0.0
  %1200 = vmatpush1.xpose.msra.mxu0 0.0
  %1201 = vmatprep.subr.mxu0 0.0
  %1202 = vmatpush1.xpose.msra.mxu0 0.0
  %1203 = vmatprep.subr.mxu0 0.0
  %1204 = vmatpush1.xpose.msra.mxu0 0.0
  %1205 = vmatprep.subr.mxu0 0.0
  %1206 = vmatpush1.xpose.msra.mxu0 0.0
  %1207 = vmatprep.subr.mxu0 0.0
  %1208 = vmatpush1.xpose.msra.mxu0 0.0
  %1209 = vmatprep.subr.mxu0 0.0
  %1210 = vmatpush1.xpose.msra.mxu0 0.0
  %1211 = vmatprep.subr.mxu0 0.0
  %1212 = vmatpush1.xpose.msra.mxu0 0.0
  %1213 = vmatprep.subr.mxu0 0.0
  %1214 = vmatpush1.xpose.msra.mxu0 0.0
  %1215 = vmatprep.subr.mxu0 0.0
  %1216 = vmatpush1.xpose.msra.mxu0 0.0
  %1217 = vmatprep.subr.mxu0 0.0
  %1218 = vmatpush1.xpose.msra.mxu0 0.0
  %1219 = vmatprep.subr.mxu0 0.0
  %1220 = vmatpush1.xpose.msra.mxu0 0.0
  %1221 = vmatprep.subr.mxu0 0.0
  %1222 = vmatpush1.xpose.msra.mxu0 0.0
  %1223 = vmatprep.subr.mxu0 0.0
  %1224 = vmatpush1.xpose.msra.mxu0 0.0
  %1225 = vmatprep.subr.mxu0 0.0
  %1226 = vmatpush1.xpose.msra.mxu0 0.0
  %1227 = vmatprep.subr.mxu0 0.0
  %1228 = vmatpush1.xpose.msra.mxu0 0.0
  %1229 = vmatprep.subr.mxu0 0.0
  %1230 = vmatpush1.xpose.msra.mxu0 %v1197
  %1231 = vmatprep.subr.mxu0 0.0
  %1232 = vmatpush2.xpose.msra.mxu0 0.0
  %1233 = vmatprep.subr.mxu0 0.0
  %1234 = vmatpush2.xpose.msra.mxu0 0.0
  %1235 = vmatprep.subr.mxu0 0.0
  %1236 = vmatpush2.xpose.msra.mxu0 0.0
  %1237 = vmatprep.subr.mxu0 0.0
  %1238 = vmatpush2.xpose.msra.mxu0 0.0
  %1239 = vmatprep.subr.mxu0 0.0
  %1240 = vmatpush2.xpose.msra.mxu0 0.0
  %1241 = vmatprep.subr.mxu0 0.0
  %1242 = vmatpush2.xpose.msra.mxu0 0.0
  %1243 = vmatprep.subr.mxu0 0.0
  %1244 = vmatpush2.xpose.msra.mxu0 0.0
  %1245 = vmatprep.subr.mxu0 0.0
  %1246 = vmatpush2.xpose.msra.mxu0 0.0
  %1247 = vmatprep.subr.mxu0 0.0
  %1248 = vmatpush2.xpose.msra.mxu0 0.0
  %1249 = vmatprep.subr.mxu0 0.0
  %1250 = vmatpush2.xpose.msra.mxu0 0.0
  %1251 = vmatprep.subr.mxu0 0.0
  %1252 = vmatpush2.xpose.msra.mxu0 0.0
  %1253 = vmatprep.subr.mxu0 0.0
  %1254 = vmatpush2.xpose.msra.mxu0 0.0
  %1255 = vmatprep.subr.mxu0 0.0
  %1256 = vmatpush2.xpose.msra.mxu0 0.0
  %1257 = vmatprep.subr.mxu0 0.0
  %1258 = vmatpush2.xpose.msra.mxu0 0.0
  %1259 = vmatprep.subr.mxu0 0.0
  %1260 = vmatpush2.xpose.msra.mxu0 0.0
  %1261 = vmatprep.subr.mxu0 0.0
  %1262 = vmatpush2.xpose.msra.mxu0 0.0
  %1263 = vmatprep.mubr.f32.mxu0 0.0
  %1264 = vmatmul.mubr.f32.gmra.mxu0 %v1195
  %v1265 = vpop.f32.mrf.mxu0
  %v1266 = vadd.f32 %v859, %v1265
  %v1267 = vpop.f32.mrf.mxu0
  %1268 = vdwg.mxu0
  %v1269 = vsel %vm199, %v1266, -inf
  %1270 = vmax.xlane.f32.xlu0 %v1269
  %v1271 = vpop.xlane.xlu0 %1270
  %v1272 = vsub.f32 %v1266, %v1271
  %v1273 = vmul.f32 %v1272, 1.442695
  %v1274 = vpow.pop %v1273
  %v1275 = vsel %vm199, %v1274, 0.0
  %1276 = vadd.xlane.f32.xlu0 %v1275
  %v1277 = vpop.xlane.xlu0 %1276
  %v1279 = vsel %vm199, %v1274, 0
  %1281 = vmatprep.subr.mxu0 0.0
  %1282 = vmatpush1.msra.mxu0 0.0
  %1283 = vmatprep.subr.mxu0 0.0
  %1284 = vmatpush1.msra.mxu0 0.0
  %1285 = vmatprep.subr.mxu0 0.0
  %1286 = vmatpush1.msra.mxu0 0.0
  %1287 = vmatprep.subr.mxu0 0.0
  %1288 = vmatpush1.msra.mxu0 0.0
  %1289 = vmatprep.subr.mxu0 0.0
  %1290 = vmatpush1.msra.mxu0 0.0
  %1291 = vmatprep.subr.mxu0 0.0
  %1292 = vmatpush1.msra.mxu0 0.0
  %1293 = vmatprep.subr.mxu0 0.0
  %1294 = vmatpush1.msra.mxu0 0.0
  %1295 = vmatprep.subr.mxu0 0.0
  %1296 = vmatpush1.msra.mxu0 0.0
  %1297 = vmatprep.subr.mxu0 0.0
  %1298 = vmatpush1.msra.mxu0 0.0
  %1299 = vmatprep.subr.mxu0 0.0
  %1300 = vmatpush1.msra.mxu0 0.0
  %1301 = vmatprep.subr.mxu0 0.0
  %1302 = vmatpush1.msra.mxu0 0.0
  %1303 = vmatprep.subr.mxu0 0.0
  %1304 = vmatpush1.msra.mxu0 0.0
  %1305 = vmatprep.subr.mxu0 0.0
  %1306 = vmatpush1.msra.mxu0 0.0
  %1307 = vmatprep.subr.mxu0 0.0
  %1308 = vmatpush1.msra.mxu0 0.0
  %1309 = vmatprep.subr.mxu0 0.0
  %1310 = vmatpush1.msra.mxu0 0.0
  %1311 = vmatprep.subr.mxu0 0.0
  %1312 = vmatpush1.msra.mxu0 %v193
  %1313 = vmatprep.subr.mxu0 0.0
  %1314 = vmatpush2.msra.mxu0 0.0
  %1315 = vmatprep.subr.mxu0 0.0
  %1316 = vmatpush2.msra.mxu0 0.0
  %1317 = vmatprep.subr.mxu0 0.0
  %1318 = vmatpush2.msra.mxu0 0.0
  %1319 = vmatprep.subr.mxu0 0.0
  %1320 = vmatpush2.msra.mxu0 0.0
  %1321 = vmatprep.subr.mxu0 0.0
  %1322 = vmatpush2.msra.mxu0 0.0
  %1323 = vmatprep.subr.mxu0 0.0
  %1324 = vmatpush2.msra.mxu0 0.0
  %1325 = vmatprep.subr.mxu0 0.0
  %1326 = vmatpush2.msra.mxu0 0.0
  %1327 = vmatprep.subr.mxu0 0.0
  %1328 = vmatpush2.msra.mxu0 0.0
  %1329 = vmatprep.subr.mxu0 0.0
  %1330 = vmatpush2.msra.mxu0 0.0
  %1331 = vmatprep.subr.mxu0 0.0
  %1332 = vmatpush2.msra.mxu0 0.0
  %1333 = vmatprep.subr.mxu0 0.0
  %1334 = vmatpush2.msra.mxu0 0.0
  %1335 = vmatprep.subr.mxu0 0.0
  %1336 = vmatpush2.msra.mxu0 0.0
  %1337 = vmatprep.subr.mxu0 0.0
  %1338 = vmatpush2.msra.mxu0 0.0
  %1339 = vmatprep.subr.mxu0 0.0
  %1340 = vmatpush2.msra.mxu0 0.0
  %1341 = vmatprep.subr.mxu0 0.0
  %1342 = vmatpush2.msra.mxu0 0.0
  %1343 = vmatprep.subr.mxu0 0.0
  %1344 = vmatpush2.msra.mxu0 0.0
  %1345 = vmatprep.mubr.f32.mxu0 0.0
  %1346 = vmatmul.mubr.f32.gmra.mxu0 %v1279
  %v1347 = vpop.f32.mrf.mxu0
  %v1348 = vadd.f32 0.0, %v1347
  %v1349 = vpop.f32.mrf.mxu0
  %1350 = vdwg.mxu0
  %v1351 = vrcp.pop %v1277
  %v1352 = vmul.f32 %v1348, %v1351
  %v1353 = vadd.f32 %v1190, %v1352
  %1354 = vrot.lane.b32.xlu0 %v191, 104
  %v1355 = vpop.permute.xlu0 %1354
  %1356 = vrot.lane.b32.xlu0 %v191, 72
  %v1357 = vpop.permute.xlu0 %1356
  %v1358 = vsel %vm199, %v1355, 0
  %v1360 = vsel %vm199, %v1357, 0
  %1362 = vmatprep.subr.mxu0 0.0
  %1363 = vmatpush1.xpose.msra.mxu0 0.0
  %1364 = vmatprep.subr.mxu0 0.0
  %1365 = vmatpush1.xpose.msra.mxu0 0.0
  %1366 = vmatprep.subr.mxu0 0.0
  %1367 = vmatpush1.xpose.msra.mxu0 0.0
  %1368 = vmatprep.subr.mxu0 0.0
  %1369 = vmatpush1.xpose.msra.mxu0 0.0
  %1370 = vmatprep.subr.mxu0 0.0
  %1371 = vmatpush1.xpose.msra.mxu0 0.0
  %1372 = vmatprep.subr.mxu0 0.0
  %1373 = vmatpush1.xpose.msra.mxu0 0.0
  %1374 = vmatprep.subr.mxu0 0.0
  %1375 = vmatpush1.xpose.msra.mxu0 0.0
  %1376 = vmatprep.subr.mxu0 0.0
  %1377 = vmatpush1.xpose.msra.mxu0 0.0
  %1378 = vmatprep.subr.mxu0 0.0
  %1379 = vmatpush1.xpose.msra.mxu0 0.0
  %1380 = vmatprep.subr.mxu0 0.0
  %1381 = vmatpush1.xpose.msra.mxu0 0.0
  %1382 = vmatprep.subr.mxu0 0.0
  %1383 = vmatpush1.xpose.msra.mxu0 0.0
  %1384 = vmatprep.subr.mxu0 0.0
  %1385 = vmatpush1.xpose.msra.mxu0 0.0
  %1386 = vmatprep.subr.mxu0 0.0
  %1387 = vmatpush1.xpose.msra.mxu0 0.0
  %1388 = vmatprep.subr.mxu0 0.0
  %1389 = vmatpush1.xpose.msra.mxu0 0.0
  %1390 = vmatprep.subr.mxu0 0.0
  %1391 = vmatpush1.xpose.msra.mxu0 0.0
  %1392 = vmatprep.subr.mxu0 0.0
  %1393 = vmatpush1.xpose.msra.mxu0 %v1360
  %1394 = vmatprep.subr.mxu0 0.0
  %1395 = vmatpush2.xpose.msra.mxu0 0.0
  %1396 = vmatprep.subr.mxu0 0.0
  %1397 = vmatpush2.xpose.msra.mxu0 0.0
  %1398 = vmatprep.subr.mxu0 0.0
  %1399 = vmatpush2.xpose.msra.mxu0 0.0
  %1400 = vmatprep.subr.mxu0 0.0
  %1401 = vmatpush2.xpose.msra.mxu0 0.0
  %1402 = vmatprep.subr.mxu0 0.0
  %1403 = vmatpush2.xpose.msra.mxu0 0.0
  %1404 = vmatprep.subr.mxu0 0.0
  %1405 = vmatpush2.xpose.msra.mxu0 0.0
  %1406 = vmatprep.subr.mxu0 0.0
  %1407 = vmatpush2.xpose.msra.mxu0 0.0
  %1408 = vmatprep.subr.mxu0 0.0
  %1409 = vmatpush2.xpose.msra.mxu0 0.0
  %1410 = vmatprep.subr.mxu0 0.0
  %1411 = vmatpush2.xpose.msra.mxu0 0.0
  %1412 = vmatprep.subr.mxu0 0.0
  %1413 = vmatpush2.xpose.msra.mxu0 0.0
  %1414 = vmatprep.subr.mxu0 0.0
  %1415 = vmatpush2.xpose.msra.mxu0 0.0
  %1416 = vmatprep.subr.mxu0 0.0
  %1417 = vmatpush2.xpose.msra.mxu0 0.0
  %1418 = vmatprep.subr.mxu0 0.0
  %1419 = vmatpush2.xpose.msra.mxu0 0.0
  %1420 = vmatprep.subr.mxu0 0.0
  %1421 = vmatpush2.xpose.msra.mxu0 0.0
  %1422 = vmatprep.subr.mxu0 0.0
  %1423 = vmatpush2.xpose.msra.mxu0 0.0
  %1424 = vmatprep.subr.mxu0 0.0
  %1425 = vmatpush2.xpose.msra.mxu0 0.0
  %1426 = vmatprep.mubr.f32.mxu0 0.0
  %1427 = vmatmul.mubr.f32.gmra.mxu0 %v1358
  %v1428 = vpop.f32.mrf.mxu0
  %v1429 = vadd.f32 %v859, %v1428
  %v1430 = vpop.f32.mrf.mxu0
  %1431 = vdwg.mxu0
  %v1432 = vsel %vm199, %v1429, -inf
  %1433 = vmax.xlane.f32.xlu0 %v1432
  %v1434 = vpop.xlane.xlu0 %1433
  %v1435 = vsub.f32 %v1429, %v1434
  %v1436 = vmul.f32 %v1435, 1.442695
  %v1437 = vpow.pop %v1436
  %v1438 = vsel %vm199, %v1437, 0.0
  %1439 = vadd.xlane.f32.xlu0 %v1438
  %v1440 = vpop.xlane.xlu0 %1439
  %1442 = vrot.lane.b32.xlu0 %v193, 96
  %v1443 = vpop.permute.xlu0 %1442
  %v1446 = vsel %vm199, %v1437, 0
  %1448 = vmatprep.subr.mxu0 0.0
  %1449 = vmatpush1.msra.mxu0 0.0
  %1450 = vmatprep.subr.mxu0 0.0
  %1451 = vmatpush1.msra.mxu0 0.0
  %1452 = vmatprep.subr.mxu0 0.0
  %1453 = vmatpush1.msra.mxu0 0.0
  %1454 = vmatprep.subr.mxu0 0.0
  %1455 = vmatpush1.msra.mxu0 0.0
  %1456 = vmatprep.subr.mxu0 0.0
  %1457 = vmatpush1.msra.mxu0 0.0
  %1458 = vmatprep.subr.mxu0 0.0
  %1459 = vmatpush1.msra.mxu0 0.0
  %1460 = vmatprep.subr.mxu0 0.0
  %1461 = vmatpush1.msra.mxu0 0.0
  %1462 = vmatprep.subr.mxu0 0.0
  %1463 = vmatpush1.msra.mxu0 0.0
  %1464 = vmatprep.subr.mxu0 0.0
  %1465 = vmatpush1.msra.mxu0 0.0
  %1466 = vmatprep.subr.mxu0 0.0
  %1467 = vmatpush1.msra.mxu0 0.0
  %1468 = vmatprep.subr.mxu0 0.0
  %1469 = vmatpush1.msra.mxu0 0.0
  %1470 = vmatprep.subr.mxu0 0.0
  %1471 = vmatpush1.msra.mxu0 0.0
  %1472 = vmatprep.subr.mxu0 0.0
  %1473 = vmatpush1.msra.mxu0 0.0
  %1474 = vmatprep.subr.mxu0 0.0
  %1475 = vmatpush1.msra.mxu0 0.0
  %1476 = vmatprep.subr.mxu0 0.0
  %1477 = vmatpush1.msra.mxu0 0.0
  %1478 = vmatprep.subr.mxu0 0.0
  %1479 = vmatpush1.msra.mxu0 %v1443
  %1480 = vmatprep.subr.mxu0 0.0
  %1481 = vmatpush2.msra.mxu0 0.0
  %1482 = vmatprep.subr.mxu0 0.0
  %1483 = vmatpush2.msra.mxu0 0.0
  %1484 = vmatprep.subr.mxu0 0.0
  %1485 = vmatpush2.msra.mxu0 0.0
  %1486 = vmatprep.subr.mxu0 0.0
  %1487 = vmatpush2.msra.mxu0 0.0
  %1488 = vmatprep.subr.mxu0 0.0
  %1489 = vmatpush2.msra.mxu0 0.0
  %1490 = vmatprep.subr.mxu0 0.0
  %1491 = vmatpush2.msra.mxu0 0.0
  %1492 = vmatprep.subr.mxu0 0.0
  %1493 = vmatpush2.msra.mxu0 0.0
  %1494 = vmatprep.subr.mxu0 0.0
  %1495 = vmatpush2.msra.mxu0 0.0
  %1496 = vmatprep.subr.mxu0 0.0
  %1497 = vmatpush2.msra.mxu0 0.0
  %1498 = vmatprep.subr.mxu0 0.0
  %1499 = vmatpush2.msra.mxu0 0.0
  %1500 = vmatprep.subr.mxu0 0.0
  %1501 = vmatpush2.msra.mxu0 0.0
  %1502 = vmatprep.subr.mxu0 0.0
  %1503 = vmatpush2.msra.mxu0 0.0
  %1504 = vmatprep.subr.mxu0 0.0
  %1505 = vmatpush2.msra.mxu0 0.0
  %1506 = vmatprep.subr.mxu0 0.0
  %1507 = vmatpush2.msra.mxu0 0.0
  %1508 = vmatprep.subr.mxu0 0.0
  %1509 = vmatpush2.msra.mxu0 0.0
  %1510 = vmatprep.subr.mxu0 0.0
  %1511 = vmatpush2.msra.mxu0 0.0
  %1512 = vmatprep.mubr.f32.mxu0 0.0
  %1513 = vmatmul.mubr.f32.gmra.mxu0 %v1446
  %v1514 = vpop.f32.mrf.mxu0
  %v1515 = vadd.f32 0.0, %v1514
  %v1516 = vpop.f32.mrf.mxu0
  %1517 = vdwg.mxu0
  %v1518 = vrcp.pop %v1440
  %v1519 = vmul.f32 %v1515, %v1518
  %v1520 = vadd.f32 %v1353, %v1519
  %v1521 = vld [vmem:[%s4] sm:$0x1]
  %v1523 = vlaneseq
  %v1524 = vshrl.u32 %v1523, 7
  %v1525 = vsub.s32 0, %v1524
  %v1526 = vrot.slane %v1521, %v1525
  %v1528 = vadd.f32 %v857, %v1526
  %v1529 = vadd.f32 %v1520, %v1526
  %v1530 = vadd.f32 %v44, %v1528
  %v1531 = vadd.f32 %v45, %v1529
  %v1532 = vld [vmem:[%s7] sm:$0x1]
  %v1533 = vld [vmem:[%s8] sm:$0x1]
  %v1534 = vsel %vm48, %v1530, 0.0
  %1535 = vadd.xlane.f32.xlu0 %v1534
  %v1536 = vpop.xlane.xlu0 %1535
  %v1537 = vsel %vm48, %v1531, 0.0
  %1538 = vadd.xlane.f32.xlu0 %v1537
  %v1539 = vpop.xlane.xlu0 %1538
  %v1540 = vmul.f32 %v1536, %v55
  %v1541 = vmul.f32 %v1539, %v55
  %v1542 = vsub.f32 %v1530, %v1540
  %v1543 = vsub.f32 %v1531, %v1541
  %v1544 = vmul.f32 %v1542, %v1542
  %v1545 = vmul.f32 %v1543, %v1543
  %v1546 = vsel %vm48, %v1544, 0.0
  %1547 = vadd.xlane.f32.xlu0 %v1546
  %v1548 = vpop.xlane.xlu0 %1547
  %v1549 = vsel %vm48, %v1545, 0.0
  %1550 = vadd.xlane.f32.xlu0 %v1549
  %v1551 = vpop.xlane.xlu0 %1550
  %v1552 = vmul.f32 %v1548, %v55
  %v1553 = vmul.f32 %v1551, %v55
  %v1554 = vadd.f32 %v1552, 1e-05
  %v1555 = vadd.f32 %v1553, 1e-05
  %v1556 = vrsqrt.pop %v1554
  %v1557 = vrsqrt.pop %v1555
  %v1558 = vmul.f32 %v1542, %v1556
  %v1559 = vmul.f32 %v1543, %v1557
  %v1561 = vlaneseq
  %v1562 = vshrl.u32 %v1561, 7
  %v1563 = vsub.s32 0, %v1562
  %v1564 = vrot.slane %v1532, %v1563
  %v1566 = vmul.f32 %v1558, %v1564
  %v1567 = vmul.f32 %v1559, %v1564
  %v1569 = vlaneseq
  %v1570 = vshrl.u32 %v1569, 7
  %v1571 = vsub.s32 0, %v1570
  %v1572 = vrot.slane %v1533, %v1571
  %v1574 = vadd.f32 %v1566, %v1572
  %v1575 = vadd.f32 %v1567, %v1572
  %v1576 = vld [vmem:[%s9] sm:$0xff]
  %v1577 = vld [vmem:[%s9 + $0x8] sm:$0xff]
  %v1578 = vld [vmem:[%s9 + $0x10] sm:$0xff]
  %v1579 = vld [vmem:[%s9 + $0x18] sm:$0xff]
  %v1580 = vld [vmem:[%s10] sm:$0x1]
  %v1582 = vlaneseq
  %v1583 = vshrl.u32 %v1582, 7
  %v1584 = vsub.s32 0, %v1583
  %v1585 = vrot.slane %v1580, %v1584
  %v1588 = vsel %vm48, %v1574, 0
  %v1591 = vsel %vm48, %v1575, 0
  %1593 = vmatprep.subr.mxu0 0.0
  %1594 = vmatpush1.msra.mxu0 0.0
  %1595 = vmatprep.subr.mxu0 0.0
  %1596 = vmatpush1.msra.mxu0 0.0
  %1597 = vmatprep.subr.mxu0 0.0
  %1598 = vmatpush1.msra.mxu0 0.0
  %1599 = vmatprep.subr.mxu0 0.0
  %1600 = vmatpush1.msra.mxu0 0.0
  %1601 = vmatprep.subr.mxu0 0.0
  %1602 = vmatpush1.msra.mxu0 0.0
  %1603 = vmatprep.subr.mxu0 0.0
  %1604 = vmatpush1.msra.mxu0 0.0
  %1605 = vmatprep.subr.mxu0 0.0
  %1606 = vmatpush1.msra.mxu0 0.0
  %1607 = vmatprep.subr.mxu0 0.0
  %1608 = vmatpush1.msra.mxu0 0.0
  %1609 = vmatprep.subr.mxu0 0.0
  %1610 = vmatpush1.msra.mxu0 0.0
  %1611 = vmatprep.subr.mxu0 0.0
  %1612 = vmatpush1.msra.mxu0 0.0
  %1613 = vmatprep.subr.mxu0 0.0
  %1614 = vmatpush1.msra.mxu0 0.0
  %1615 = vmatprep.subr.mxu0 0.0
  %1616 = vmatpush1.msra.mxu0 0.0
  %1617 = vmatprep.subr.mxu0 0.0
  %1618 = vmatpush1.msra.mxu0 %v1579
  %1619 = vmatprep.subr.mxu0 0.0
  %1620 = vmatpush1.msra.mxu0 %v1578
  %1621 = vmatprep.subr.mxu0 0.0
  %1622 = vmatpush1.msra.mxu0 %v1577
  %1623 = vmatprep.subr.mxu0 0.0
  %1624 = vmatpush1.msra.mxu0 %v1576
  %1625 = vmatprep.subr.mxu0 0.0
  %1626 = vmatpush2.msra.mxu0 0.0
  %1627 = vmatprep.subr.mxu0 0.0
  %1628 = vmatpush2.msra.mxu0 0.0
  %1629 = vmatprep.subr.mxu0 0.0
  %1630 = vmatpush2.msra.mxu0 0.0
  %1631 = vmatprep.subr.mxu0 0.0
  %1632 = vmatpush2.msra.mxu0 0.0
  %1633 = vmatprep.subr.mxu0 0.0
  %1634 = vmatpush2.msra.mxu0 0.0
  %1635 = vmatprep.subr.mxu0 0.0
  %1636 = vmatpush2.msra.mxu0 0.0
  %1637 = vmatprep.subr.mxu0 0.0
  %1638 = vmatpush2.msra.mxu0 0.0
  %1639 = vmatprep.subr.mxu0 0.0
  %1640 = vmatpush2.msra.mxu0 0.0
  %1641 = vmatprep.subr.mxu0 0.0
  %1642 = vmatpush2.msra.mxu0 0.0
  %1643 = vmatprep.subr.mxu0 0.0
  %1644 = vmatpush2.msra.mxu0 0.0
  %1645 = vmatprep.subr.mxu0 0.0
  %1646 = vmatpush2.msra.mxu0 0.0
  %1647 = vmatprep.subr.mxu0 0.0
  %1648 = vmatpush2.msra.mxu0 0.0
  %1649 = vmatprep.subr.mxu0 0.0
  %1650 = vmatpush2.msra.mxu0 0.0
  %1651 = vmatprep.subr.mxu0 0.0
  %1652 = vmatpush2.msra.mxu0 0.0
  %1653 = vmatprep.subr.mxu0 0.0
  %1654 = vmatpush2.msra.mxu0 0.0
  %1655 = vmatprep.subr.mxu0 0.0
  %1656 = vmatpush2.msra.mxu0 0.0
  %1657 = vmatprep.mubr.f32.mxu0 0.0
  %1658 = vmatmul.mubr.f32.gmra.mxu0 %v1588
  %v1659 = vpop.f32.mrf.mxu0
  %v1660 = vadd.f32 %v1585, %v1659
  %v1661 = vpop.f32.mrf.mxu0
  %1662 = vmatprep.mubr.f32.mxu0 0.0
  %1663 = vmatmul.mubr.f32.gmra.mxu0 %v1591
  %v1664 = vpop.f32.mrf.mxu0
  %v1665 = vadd.f32 %v1585, %v1664
  %v1666 = vpop.f32.mrf.mxu0
  %1667 = vdwg.mxu0
  %v1668 = vmul.f32 %v1660, 1.702
  %v1669 = vmul.f32 %v1665, 1.702
  %v1670 = vxor.u32 %v1668, 2147483648
  %v1671 = vxor.u32 %v1669, 2147483648
  %v1672 = vmul.f32 %v1670, 1.442695
  %v1673 = vpow.pop %v1672
  %v1674 = vmul.f32 %v1671, 1.442695
  %v1675 = vpow.pop %v1674
  %v1676 = vadd.f32 %v1673, 1.0
  %v1677 = vadd.f32 %v1675, 1.0
  %v1678 = vrcp.pop %v1676
  %v1679 = vmul.f32 1.0, %v1678
  %v1680 = vrcp.pop %v1677
  %v1681 = vmul.f32 1.0, %v1680
  %v1682 = vmul.f32 %v1660, %v1679
  %v1683 = vmul.f32 %v1665, %v1681
  %v1684 = vld [vmem:[%s11] sm:$0xff]
  %v1685 = vld [vmem:[%s11 + $0x8] sm:$0xff]
  %v1686 = vld [vmem:[%s11 + $0x10] sm:$0xff]
  %v1687 = vld [vmem:[%s11 + $0x18] sm:$0xff]
  %v1688 = vld [vmem:[%s11 + $0x20] sm:$0xff]
  %v1689 = vld [vmem:[%s11 + $0x28] sm:$0xff]
  %v1690 = vld [vmem:[%s11 + $0x30] sm:$0xff]
  %v1691 = vld [vmem:[%s11 + $0x38] sm:$0xff]
  %v1692 = vld [vmem:[%s11 + $0x40] sm:$0xff]
  %v1693 = vld [vmem:[%s11 + $0x48] sm:$0xff]
  %v1694 = vld [vmem:[%s11 + $0x50] sm:$0xff]
  %v1695 = vld [vmem:[%s11 + $0x58] sm:$0xff]
  %v1696 = vld [vmem:[%s11 + $0x60] sm:$0xff]
  %v1697 = vld [vmem:[%s11 + $0x68] sm:$0xff]
  %v1698 = vld [vmem:[%s11 + $0x70] sm:$0xff]
  %v1699 = vld [vmem:[%s11 + $0x78] sm:$0xff]
  %v1700 = vld [vmem:[%s12] sm:$0x1]
  %v1702 = vlaneseq
  %v1703 = vshrl.u32 %v1702, 7
  %v1704 = vsub.s32 0, %v1703
  %v1705 = vrot.slane %v1700, %v1704
  %1707 = vmatprep.subr.mxu0 0.0
  %1708 = vmatpush1.msra.mxu0 %v1699
  %1709 = vmatprep.subr.mxu0 0.0
  %1710 = vmatpush1.msra.mxu0 %v1698
  %1711 = vmatprep.subr.mxu0 0.0
  %1712 = vmatpush1.msra.mxu0 %v1697
  %1713 = vmatprep.subr.mxu0 0.0
  %1714 = vmatpush1.msra.mxu0 %v1696
  %1715 = vmatprep.subr.mxu0 0.0
  %1716 = vmatpush1.msra.mxu0 %v1695
  %1717 = vmatprep.subr.mxu0 0.0
  %1718 = vmatpush1.msra.mxu0 %v1694
  %1719 = vmatprep.subr.mxu0 0.0
  %1720 = vmatpush1.msra.mxu0 %v1693
  %1721 = vmatprep.subr.mxu0 0.0
  %1722 = vmatpush1.msra.mxu0 %v1692
  %1723 = vmatprep.subr.mxu0 0.0
  %1724 = vmatpush1.msra.mxu0 %v1691
  %1725 = vmatprep.subr.mxu0 0.0
  %1726 = vmatpush1.msra.mxu0 %v1690
  %1727 = vmatprep.subr.mxu0 0.0
  %1728 = vmatpush1.msra.mxu0 %v1689
  %1729 = vmatprep.subr.mxu0 0.0
  %1730 = vmatpush1.msra.mxu0 %v1688
  %1731 = vmatprep.subr.mxu0 0.0
  %1732 = vmatpush1.msra.mxu0 %v1687
  %1733 = vmatprep.subr.mxu0 0.0
  %1734 = vmatpush1.msra.mxu0 %v1686
  %1735 = vmatprep.subr.mxu0 0.0
  %1736 = vmatpush1.msra.mxu0 %v1685
  %1737 = vmatprep.subr.mxu0 0.0
  %1738 = vmatpush1.msra.mxu0 %v1684
  %1739 = vmatprep.subr.mxu0 0.0
  %1740 = vmatpush2.msra.mxu0 0.0
  %1741 = vmatprep.subr.mxu0 0.0
  %1742 = vmatpush2.msra.mxu0 0.0
  %1743 = vmatprep.subr.mxu0 0.0
  %1744 = vmatpush2.msra.mxu0 0.0
  %1745 = vmatprep.subr.mxu0 0.0
  %1746 = vmatpush2.msra.mxu0 0.0
  %1747 = vmatprep.subr.mxu0 0.0
  %1748 = vmatpush2.msra.mxu0 0.0
  %1749 = vmatprep.subr.mxu0 0.0
  %1750 = vmatpush2.msra.mxu0 0.0
  %1751 = vmatprep.subr.mxu0 0.0
  %1752 = vmatpush2.msra.mxu0 0.0
  %1753 = vmatprep.subr.mxu0 0.0
  %1754 = vmatpush2.msra.mxu0 0.0
  %1755 = vmatprep.subr.mxu0 0.0
  %1756 = vmatpush2.msra.mxu0 0.0
  %1757 = vmatprep.subr.mxu0 0.0
  %1758 = vmatpush2.msra.mxu0 0.0
  %1759 = vmatprep.subr.mxu0 0.0
  %1760 = vmatpush2.msra.mxu0 0.0
  %1761 = vmatprep.subr.mxu0 0.0
  %1762 = vmatpush2.msra.mxu0 0.0
  %1763 = vmatprep.subr.mxu0 0.0
  %1764 = vmatpush2.msra.mxu0 0.0
  %1765 = vmatprep.subr.mxu0 0.0
  %1766 = vmatpush2.msra.mxu0 0.0
  %1767 = vmatprep.subr.mxu0 0.0
  %1768 = vmatpush2.msra.mxu0 0.0
  %1769 = vmatprep.subr.mxu0 0.0
  %1770 = vmatpush2.msra.mxu0 0.0
  %1771 = vmatprep.mubr.f32.mxu0 0.0
  %1772 = vmatmul.mubr.f32.gmra.mxu0 %v1682
  %v1773 = vpop.f32.mrf.mxu0
  %v1774 = vadd.f32 %v1705, %v1773
  %v1775 = vpop.f32.mrf.mxu0
  %1776 = vmatprep.mubr.f32.mxu0 0.0
  %1777 = vmatmul.mubr.f32.gmra.mxu0 %v1683
  %v1778 = vpop.f32.mrf.mxu0
  %v1779 = vadd.f32 %v1705, %v1778
  %v1780 = vpop.f32.mrf.mxu0
  %1781 = vdwg.mxu0
  %v1782 = vadd.f32 %v1530, %v1774
  %v1783 = vadd.f32 %v1531, %v1779
  %1784 = vst.msk [vmem:[%s13] sm:$0xff] %vm48, %v1782
  %1785 = vst.msk [vmem:[%s13 + $0x8] sm:$0xff] %vm48, %v1783
  // Predicated region
  $region54: #{residual_attention_block.1} parent=0 // pred_check
    _
  $region55: #{residual_attention_block.1} parent=0 // pred_check_branch
    %1787 = sbr.rel (0) target = $region57
  $region56: #{residual_attention_block.1} parent=0 // pred_region
    _
  $region57: #{residual_attention_block.1} parent=0 // pred_fallthru
    _
  // Predicated region
  $region58: #{residual_attention_block.1} parent=0 // pred_check
    _
  $region59: #{residual_attention_block.1} parent=0 // pred_check_branch
    %1789 = sbr.rel (0) target = $region61
  $region60: #{residual_attention_block.1} parent=0 // pred_region
    _
  $region61: #{residual_attention_block.1} parent=0 // pred_fallthru
    _

</llo_original>
